<compile_context>
chip_gen: v7x
topology: tpu7x:2x2x1
jax: 0.10.0
libtpu: 0.0.40
codegen_flags: <defaults>
</compile_context>

<pallas_src>
import numpy as np
import jax
import jax.numpy as jnp
from jax.experimental import pallas as pl
from jax.experimental.pallas import tpu as pltpu

LEAKY_SLOPE = 0.02
BN_EPS = 1e-5


# ------------------------------ Pallas kernel -------------------------------

def _fused_head_kernel(team_ref, edge_ref, w1t_ref, w1e_ref, b1_ref,
                       w2_ref, b2_ref, o_ref):
    """post_cat (BN pre-folded) -> LeakyReLU(0.02) -> final_linear, fused."""
    # post_cat Linear over the virtual concat [team_pair | edge_attr] as a
    # sum of two MXU dots (avoids materializing x_cat / an extra HBM pass).
    h = (jnp.dot(team_ref[...], w1t_ref[...], preferred_element_type=jnp.float32)
         + jnp.dot(edge_ref[...], w1e_ref[...], preferred_element_type=jnp.float32)
         + b1_ref[...])
    # BatchNorm1d(eval) is already folded into w1/b1 at param-prep time.
    # LeakyReLU(0.02)
    h = jnp.where(h >= 0, h, LEAKY_SLOPE * h)
    # Dropout: identity in eval mode.
    # TODO(synk): training-mode stochastic dropout not implemented (eval-mode identity).
    o_ref[...] = jnp.dot(h, w2_ref[...], preferred_element_type=jnp.float32) + b2_ref[...]


def _round_up(x, m):
    return ((x + m - 1) // m) * m


def _pick_tile(G, block_g):
    """Graph-axis tile: big (overhead-bound kernel), multiple of 8, and chosen
    so the grid has >= 2 steps whenever possible (v7x megacore sharding)."""
    if G <= 8:
        return G
    half = -(-G // 2)                       # ceil(G / 2)
    tg = min(block_g, _round_up(half, 8))   # multiple of 8, < G for all G > 8
    return tg


def _fused_head(team_pairs, edge_attr, fp, *, block_g=2048):
    G, d_team = team_pairs.shape
    d_edge = edge_attr.shape[1]
    C = fp["w2"].shape[1]

    tg = _pick_tile(G, block_g)
    grid = (pl.cdiv(G, tg),)

    def rows(i):    # row-blocked operands (activations / output)
        return (i, 0)

    def whole(i):   # weights: same full block every grid step (no re-DMA)
        return (0, 0)

    return pl.pallas_call(
        _fused_head_kernel,
        out_shape=jax.ShapeDtypeStruct((G, C), jnp.float32),
        grid=grid,
        in_specs=[
            pl.BlockSpec((tg, d_team), rows),
            pl.BlockSpec((tg, d_edge), rows),
            pl.BlockSpec(fp["w1_team"].shape, whole),
            pl.BlockSpec(fp["w1_edge"].shape, whole),
            pl.BlockSpec(fp["b1"].shape, whole),
            pl.BlockSpec(fp["w2"].shape, whole),
            pl.BlockSpec(fp["b2"].shape, whole),
        ],
        out_specs=pl.BlockSpec((tg, C), rows),
        compiler_params=pltpu.CompilerParams(
            dimension_semantics=("parallel",),
            vmem_limit_bytes=32 * 1024 * 1024),
    )(team_pairs, edge_attr, fp["w1_team"], fp["w1_edge"], fp["b1"],
      fp["w2"], fp["b2"])


# ------------------------------ forward glue --------------------------------

def _head_xla(team_pairs, edge_attr, fp):
    """Plain-XLA path for tiny batches (pallas_call launch cost dominates)."""
    h = (team_pairs @ fp["w1_team"] + edge_attr @ fp["w1_edge"] + fp["b1"])
    h = jnp.where(h >= 0, h, LEAKY_SLOPE * h)
    return h @ fp["w2"] + fp["b2"]


def tclassifier_forward(x_team, edge_attr, folded_params, *,
                        block_g=2048, min_pallas_rows=512):
    """x_team: [2G, team_in]; edge_attr: [G, edge_in] (one team<->team edge per graph)."""
    G = edge_attr.shape[0]
    # Per-graph torch.cat((x_team[2i], x_team[2i+1]), -1) == row-major reshape.
    team_pairs = x_team.reshape(G, -1)
    if G < min_pallas_rows:
        return _head_xla(team_pairs, edge_attr, folded_params)
    return _fused_head(team_pairs, edge_attr, folded_params, block_g=block_g)


# --------------------------- params & param folding -------------------------

def init_params(key, team_in, hidden, edge_in, num_classes):
    """Raw PyTorch-style params for the submodules used in forward()."""
    d_cat = 2 * team_in + edge_in
    ks = jax.random.split(key, 6)

    def lin(k, fan_in, fan_out):
        kw, kb = jax.random.split(k)
        bound = 1.0 / np.sqrt(fan_in)
        w = jax.random.uniform(kw, (fan_in, fan_out), jnp.float32, -bound, bound)
        b = jax.random.uniform(kb, (1, fan_out), jnp.float32, -bound, bound)
        return w, b

    w1, b1 = lin(ks[0], d_cat, hidden)        # post_cat
    w2, b2 = lin(ks[1], hidden, num_classes)  # final_linear
    return dict(
        w1=w1, b1=b1, w2=w2, b2=b2,
        bn_gamma=jax.random.uniform(ks[2], (1, hidden), jnp.float32, 0.5, 1.5),
        bn_beta=jax.random.uniform(ks[3], (1, hidden), jnp.float32, -0.5, 0.5),
        bn_mean=jax.random.uniform(ks[4], (1, hidden), jnp.float32, -0.5, 0.5),
        bn_var=jax.random.uniform(ks[5], (1, hidden), jnp.float32, 0.5, 1.5),
    )


def fold_params(raw, team_in):
    """One-time constant fold: eval-mode BN into post_cat, and split W1 by input segment."""
    scale = raw["bn_gamma"] * jax.lax.rsqrt(raw["bn_var"] + BN_EPS)      # [1, H]
    w1f = raw["w1"] * scale                                              # scale columns
    b1f = (raw["b1"] - raw["bn_mean"]) * scale + raw["bn_beta"]
    d_team = 2 * team_in
    return dict(
        w1_team=w1f[:d_team],      # [2*team_in, H]
        w1_edge=w1f[d_team:],      # [edge_in,   H]
        b1=b1f,                    # [1, H]
        w2=raw["w2"], b2=raw["b2"],
    )


# ------------------------------- pure-JAX ref --------------------------------

def reference_forward(x_team, edge_attr, raw):
    G = edge_attr.shape[0]
    hp = jax.lax.Precision.HIGHEST
    x = jnp.concatenate([x_team.reshape(G, -1), edge_attr], axis=-1)
    h = jnp.dot(x, raw["w1"], precision=hp) + raw["b1"]
    h = (h - raw["bn_mean"]) / jnp.sqrt(raw["bn_var"] + BN_EPS) * raw["bn_gamma"] + raw["bn_beta"]
    h = jnp.where(h >= 0, h, LEAKY_SLOPE * h)
    return jnp.dot(h, raw["w2"], precision=hp) + raw["b2"]


# ---------------------------------- main -------------------------------------

if __name__ == "__main__":
    key = jax.random.PRNGKey(0)
    team_in, edge_in, hidden, num_classes = 8, 6, 32, 3

    kx1, kx2, kx3, kx4, kp = jax.random.split(key, 5)
    raw = init_params(kp, team_in, hidden, edge_in, num_classes)
    fp = fold_params(raw, team_in)

    fwd = jax.jit(tclassifier_forward, static_argnames=("block_g", "min_pallas_rows"))

    # ---- Pallas path: G large enough for a >=2-step grid (megacore-friendly) ----
    G = 1024
    x_team = jax.random.normal(kx1, (2 * G, team_in), jnp.float32)       # [2G, team_in]
    edge_attr = jax.random.normal(kx2, (G, edge_in), jnp.float32)        # [G, edge_in]

    out = jax.block_until_ready(fwd(x_team, edge_attr, fp))
    ref = reference_forward(x_team, edge_attr, raw)
    assert out.shape == (G, num_classes)
    assert np.allclose(np.asarray(out), np.asarray(ref), atol=1e-3, rtol=1e-3), \
        "Pallas kernel mismatch vs reference"

    # ---- tiny-batch fallback path (plain XLA; avoids kernel launch overhead) ----
    Gs = 4
    x_team_s = jax.random.normal(kx3, (2 * Gs, team_in), jnp.float32)
    edge_attr_s = jax.random.normal(kx4, (Gs, edge_in), jnp.float32)
    out_s = jax.block_until_ready(fwd(x_team_s, edge_attr_s, fp))
    ref_s = reference_forward(x_team_s, edge_attr_s, raw)
    assert out_s.shape == (Gs, num_classes)
    assert np.allclose(np.asarray(out_s), np.asarray(ref_s), atol=1e-3, rtol=1e-3), \
        "fallback mismatch vs reference"

    print("KERNEL_OK")
</pallas_src>

<mosaic_0001>
module attributes {stable_mosaic.version = 11 : i64} {
  func.func @_fused_head_kernel(%arg0: i32, %arg1: memref<512x16xf32, #tpu.memory_space<vmem>>, %arg2: memref<512x6xf32, #tpu.memory_space<vmem>>, %arg3: memref<16x32xf32, #tpu.memory_space<vmem>>, %arg4: memref<6x32xf32, #tpu.memory_space<vmem>>, %arg5: memref<1x32xf32, #tpu.memory_space<vmem>>, %arg6: memref<32x3xf32, #tpu.memory_space<vmem>>, %arg7: memref<1x3xf32, #tpu.memory_space<vmem>>, %arg8: memref<512x3xf32, #tpu.memory_space<vmem>>) attributes {dimension_semantics = [#tpu.dimension_semantics<parallel>], iteration_bounds = array<i64: 2>, scalar_prefetch = 0 : i64, scratch_operands = 0 : i64, tpu.core_type = #tpu.core_type<tc>, window_params = [{transform_indices = @transform_0, window_bounds = array<i64: 512, 16>}, {transform_indices = @transform_1, window_bounds = array<i64: 512, 6>}, {pipeline_mode = #tpu.pipeline_mode<synchronous>, transform_indices = @transform_2, window_bounds = array<i64: 16, 32>}, {pipeline_mode = #tpu.pipeline_mode<synchronous>, transform_indices = @transform_3, window_bounds = array<i64: 6, 32>}, {pipeline_mode = #tpu.pipeline_mode<synchronous>, transform_indices = @transform_4, window_bounds = array<i64: 1, 32>}, {pipeline_mode = #tpu.pipeline_mode<synchronous>, transform_indices = @transform_5, window_bounds = array<i64: 32, 3>}, {pipeline_mode = #tpu.pipeline_mode<synchronous>, transform_indices = @transform_6, window_bounds = array<i64: 1, 3>}, {transform_indices = @transform_7, window_bounds = array<i64: 512, 3>}]} {
    %c0 = arith.constant 0 : index
    %c0_0 = arith.constant 0 : index
    %0 = vector.load %arg1[%c0, %c0_0] : memref<512x16xf32, #tpu.memory_space<vmem>>, vector<512x16xf32>
    %c0_1 = arith.constant 0 : index
    %c0_2 = arith.constant 0 : index
    %1 = vector.load %arg3[%c0_1, %c0_2] : memref<16x32xf32, #tpu.memory_space<vmem>>, vector<16x32xf32>
    %cst = arith.constant dense<0.000000e+00> : vector<512x32xf32>
    %2 = tpu.matmul %0, %1, %cst {dimension_numbers = #tpu.dot_dimension_numbers<[1], [0], [0], [1], [0, 0, 1, 1], [], []>} : vector<512x16xf32>, vector<16x32xf32>, vector<512x32xf32> -> vector<512x32xf32>
    %c0_3 = arith.constant 0 : index
    %c0_4 = arith.constant 0 : index
    %3 = vector.load %arg2[%c0_3, %c0_4] : memref<512x6xf32, #tpu.memory_space<vmem>>, vector<512x6xf32>
    %c0_5 = arith.constant 0 : index
    %c0_6 = arith.constant 0 : index
    %4 = vector.load %arg4[%c0_5, %c0_6] : memref<6x32xf32, #tpu.memory_space<vmem>>, vector<6x32xf32>
    %cst_7 = arith.constant dense<0.000000e+00> : vector<512x32xf32>
    %5 = tpu.matmul %3, %4, %cst_7 {dimension_numbers = #tpu.dot_dimension_numbers<[1], [0], [0], [1], [0, 0, 1, 1], [], []>} : vector<512x6xf32>, vector<6x32xf32>, vector<512x32xf32> -> vector<512x32xf32>
    %6 = arith.addf %2, %5 : vector<512x32xf32>
    %c0_8 = arith.constant 0 : index
    %c0_9 = arith.constant 0 : index
    %7 = vector.load %arg5[%c0_8, %c0_9] : memref<1x32xf32, #tpu.memory_space<vmem>>, vector<1x32xf32>
    %8 = vector.broadcast %7 : vector<1x32xf32> to vector<512x32xf32>
    %9 = arith.addf %6, %8 : vector<512x32xf32>
    %cst_10 = arith.constant 0.000000e+00 : f32
    %10 = vector.broadcast %cst_10 : f32 to vector<512x32xf32>
    %11 = arith.cmpf oge, %9, %10 : vector<512x32xf32>
    %cst_11 = arith.constant 2.000000e-02 : f32
    %12 = vector.broadcast %cst_11 : f32 to vector<512x32xf32>
    %13 = arith.mulf %12, %9 : vector<512x32xf32>
    %14 = arith.select %11, %9, %13 : vector<512x32xi1>, vector<512x32xf32>
    %c0_12 = arith.constant 0 : index
    %c0_13 = arith.constant 0 : index
    %15 = vector.load %arg6[%c0_12, %c0_13] : memref<32x3xf32, #tpu.memory_space<vmem>>, vector<32x3xf32>
    %cst_14 = arith.constant dense<0.000000e+00> : vector<512x3xf32>
    %16 = tpu.matmul %14, %15, %cst_14 {dimension_numbers = #tpu.dot_dimension_numbers<[1], [0], [0], [1], [0, 0, 1, 1], [], []>} : vector<512x32xf32>, vector<32x3xf32>, vector<512x3xf32> -> vector<512x3xf32>
    %c0_15 = arith.constant 0 : index
    %c0_16 = arith.constant 0 : index
    %17 = vector.load %arg7[%c0_15, %c0_16] : memref<1x3xf32, #tpu.memory_space<vmem>>, vector<1x3xf32>
    %18 = vector.broadcast %17 : vector<1x3xf32> to vector<512x3xf32>
    %19 = arith.addf %16, %18 : vector<512x3xf32>
    %c0_17 = arith.constant 0 : index
    %c0_18 = arith.constant 0 : index
    %20 = vector.load %arg8[%c0_17, %c0_18] : memref<512x3xf32, #tpu.memory_space<vmem>>, vector<512x3xf32>
    tpu.vector_store %arg8[%c0_17, %c0_18], %19 {strides = array<i32>} : memref<512x3xf32, #tpu.memory_space<vmem>>, vector<512x3xf32>,
    return
  }
  func.func @transform_0(%arg0: i32) -> (i32, i32) {
    %c0_i32 = arith.constant 0 : i32
    %c0_i32_0 = arith.constant 0 : i32
    return %arg0, %c0_i32 : i32, i32
  }
  func.func @transform_1(%arg0: i32) -> (i32, i32) {
    %c0_i32 = arith.constant 0 : i32
    %c0_i32_0 = arith.constant 0 : i32
    return %arg0, %c0_i32 : i32, i32
  }
  func.func @transform_2(%arg0: i32) -> (i32, i32) {
    %c0_i32 = arith.constant 0 : i32
    %c0_i32_0 = arith.constant 0 : i32
    %c0_i32_1 = arith.constant 0 : i32
    return %c0_i32, %c0_i32_0 : i32, i32
  }
  func.func @transform_3(%arg0: i32) -> (i32, i32) {
    %c0_i32 = arith.constant 0 : i32
    %c0_i32_0 = arith.constant 0 : i32
    %c0_i32_1 = arith.constant 0 : i32
    return %c0_i32, %c0_i32_0 : i32, i32
  }
  func.func @transform_4(%arg0: i32) -> (i32, i32) {
    %c0_i32 = arith.constant 0 : i32
    %c0_i32_0 = arith.constant 0 : i32
    %c0_i32_1 = arith.constant 0 : i32
    return %c0_i32, %c0_i32_0 : i32, i32
  }
  func.func @transform_5(%arg0: i32) -> (i32, i32) {
    %c0_i32 = arith.constant 0 : i32
    %c0_i32_0 = arith.constant 0 : i32
    %c0_i32_1 = arith.constant 0 : i32
    return %c0_i32, %c0_i32_0 : i32, i32
  }
  func.func @transform_6(%arg0: i32) -> (i32, i32) {
    %c0_i32 = arith.constant 0 : i32
    %c0_i32_0 = arith.constant 0 : i32
    %c0_i32_1 = arith.constant 0 : i32
    return %c0_i32, %c0_i32_0 : i32, i32
  }
  func.func @transform_7(%arg0: i32) -> (i32, i32) {
    %c0_i32 = arith.constant 0 : i32
    %c0_i32_0 = arith.constant 0 : i32
    return %arg0, %c0_i32 : i32, i32
  }
}

</mosaic_0001>

<llo_original>
// kernel: tclassifier_forward.1
$region0: #{tclassifier_forward.1}
  #allocation0 [shape = 'u32[]', space=smem, size = 0x4, offset = 0x4, fixed_abs, tag = 'smem constant byte address 0x4 - core index']
  #allocation1 [shape = 'u32[144,128]{1,0:T(1,128)}', space=vmem, size = 0x12000, scoped, tag = 'internal scratch']
  %s0 = inlined_call_operand.vmem [shape: f32[1024,16], index: 0, kind: input, shape index: {}]
  %s1 = inlined_call_operand.vmem [shape: f32[1024,6], index: 1, kind: input, shape index: {}]
  %s2 = inlined_call_operand.vmem [shape: f32[16,32], index: 2, kind: input, shape index: {}]
  %s3 = inlined_call_operand.vmem [shape: f32[6,32], index: 3, kind: input, shape index: {}]
  %s4 = inlined_call_operand.vmem [shape: f32[1,32], index: 4, kind: input, shape index: {}]
  %s5 = inlined_call_operand.vmem [shape: f32[32,3], index: 5, kind: input, shape index: {}]
  %s6 = inlined_call_operand.vmem [shape: f32[1,3], index: 6, kind: input, shape index: {}]
  %s7 = inlined_call_operand.vmem [shape: f32[1024,3], index: 7, kind: output, shape index: {}]
  %s8 = sld [smem:[#allocation0]]
  $region61: #{tclassifier_forward.1} parent=0
    _
  %s10 = ssub.s32 1, %s8
  %s11 = scalar_select 0, %s10, %s8
  loop: start=0, step=1, limit=4
  $region2: #{tclassifier_forward.1} parent=0 // loop_pre_header
    _
  $region3: #{tclassifier_forward.1} parent=0 // loop_header
    %s13 = sphi 0, %s17
    %p14 = scmp.ge.s32.totalorder %s13, 4
    %s23 = sphi 0, %s25
    %s26 = sphi 0, %s23
    %s27 = sphi 0, %s26
    %s43 = sphi 0, %s27
    %s49 = sphi 0, %s51
    %s52 = sphi 0, %s49
    %s53 = sphi 0, %s52
    %s69 = sphi 0, %s53
    %s73 = sphi 0, %s73
    %s75 = sphi 0, %s73
    %s76 = sphi 0, %s75
    %s90 = sphi 0, %s76
    %s94 = sphi 0, %s94
    %s96 = sphi 0, %s94
    %s97 = sphi 0, %s96
    %s111 = sphi 0, %s97
    %s115 = sphi 0, %s115
    %s117 = sphi 0, %s115
    %s118 = sphi 0, %s117
    %s132 = sphi 0, %s118
    %s136 = sphi 0, %s136
    %s138 = sphi 0, %s136
    %s139 = sphi 0, %s138
    %s153 = sphi 0, %s139
    %s157 = sphi 0, %s157
    %s159 = sphi 0, %s157
    %s160 = sphi 0, %s159
    %s174 = sphi 0, %s160
    %s180 = sphi 0, %s182
    %s183 = sphi 0, %s180
    %s184 = sphi 0, %s183
    %s200 = sphi 0, %s184
  $region4: #{tclassifier_forward.1} parent=0 // loop_header_branch
    %16 = sbr.rel (%p14) target = $region8
  $region5: #{tclassifier_forward.1} parent=0 // loop_body
    %s18 = ssub.s32 %s13, 1
    %s19 = ssub.s32 %s13, 2
    %s20 = sadd.s32 %s13, 1
    %s21 = ssub.s32 %s13, %s20
    %p22 = scmp.eq.s32.totalorder %s21, 0
    %s24 = sadd.s32 %s23, 1
    %s25 = scalar_select %p22, %s23, %s24
    %p28 = pneg %p22
    %p29 = scmp.eq.s32.totalorder %s13, 1
    %p30 = por %p28, %p29
    %p31 = scmp.ne.s32.totalorder %s23, %s26
    %p32 = scmp.eq.s32.totalorder %s13, 0
    %p33 = por %p31, %p32
    %p34 = scmp.ne.s32.totalorder %s23, %s26
    %p35 = scmp.eq.s32.totalorder %s18, 1
    %p36 = por %p34, %p35
    %p37 = scmp.ne.s32.totalorder %s26, %s27
    %p38 = scmp.eq.s32.totalorder %s18, 0
    %p39 = por %p37, %p38
    %p40 = scmp.ne.s32.totalorder %s26, %s27
    %p41 = scmp.eq.s32.totalorder %s19, 1
    %p42 = por %p40, %p41
    %p44 = scmp.ne.s32.totalorder %s27, %s43
    %p45 = scmp.eq.s32.totalorder %s19, 0
    %p46 = por %p44, %p45
    %s47 = ssub.s32 %s13, %s20
    %p48 = scmp.eq.s32.totalorder %s47, 0
    %s50 = sadd.s32 %s49, 1
    %s51 = scalar_select %p48, %s49, %s50
    %p54 = pneg %p48
    %p55 = scmp.eq.s32.totalorder %s13, 1
    %p56 = por %p54, %p55
    %p57 = scmp.ne.s32.totalorder %s49, %s52
    %p58 = scmp.eq.s32.totalorder %s13, 0
    %p59 = por %p57, %p58
    %p60 = scmp.ne.s32.totalorder %s49, %s52
    %p61 = scmp.eq.s32.totalorder %s18, 1
    %p62 = por %p60, %p61
    %p63 = scmp.ne.s32.totalorder %s52, %s53
    %p64 = scmp.eq.s32.totalorder %s18, 0
    %p65 = por %p63, %p64
    %p66 = scmp.ne.s32.totalorder %s52, %s53
    %p67 = scmp.eq.s32.totalorder %s19, 1
    %p68 = por %p66, %p67
    %p70 = scmp.ne.s32.totalorder %s53, %s69
    %p71 = scmp.eq.s32.totalorder %s19, 0
    %p72 = por %p70, %p71
    %s74 = sadd.s32 %s73, 1
    %p77 = scmp.eq.s32.totalorder %s13, 1
    %p78 = scmp.ne.s32.totalorder %s73, %s75
    %p79 = scmp.eq.s32.totalorder %s13, 0
    %p80 = por %p78, %p79
    %p81 = scmp.ne.s32.totalorder %s73, %s75
    %p82 = scmp.eq.s32.totalorder %s18, 1
    %p83 = por %p81, %p82
    %p84 = scmp.ne.s32.totalorder %s75, %s76
    %p85 = scmp.eq.s32.totalorder %s18, 0
    %p86 = por %p84, %p85
    %p87 = scmp.ne.s32.totalorder %s75, %s76
    %p88 = scmp.eq.s32.totalorder %s19, 1
    %p89 = por %p87, %p88
    %p91 = scmp.ne.s32.totalorder %s76, %s90
    %p92 = scmp.eq.s32.totalorder %s19, 0
    %p93 = por %p91, %p92
    %s95 = sadd.s32 %s94, 1
    %p98 = scmp.eq.s32.totalorder %s13, 1
    %p99 = scmp.ne.s32.totalorder %s94, %s96
    %p100 = scmp.eq.s32.totalorder %s13, 0
    %p101 = por %p99, %p100
    %p102 = scmp.ne.s32.totalorder %s94, %s96
    %p103 = scmp.eq.s32.totalorder %s18, 1
    %p104 = por %p102, %p103
    %p105 = scmp.ne.s32.totalorder %s96, %s97
    %p106 = scmp.eq.s32.totalorder %s18, 0
    %p107 = por %p105, %p106
    %p108 = scmp.ne.s32.totalorder %s96, %s97
    %p109 = scmp.eq.s32.totalorder %s19, 1
    %p110 = por %p108, %p109
    %p112 = scmp.ne.s32.totalorder %s97, %s111
    %p113 = scmp.eq.s32.totalorder %s19, 0
    %p114 = por %p112, %p113
    %s116 = sadd.s32 %s115, 1
    %p119 = scmp.eq.s32.totalorder %s13, 1
    %p120 = scmp.ne.s32.totalorder %s115, %s117
    %p121 = scmp.eq.s32.totalorder %s13, 0
    %p122 = por %p120, %p121
    %p123 = scmp.ne.s32.totalorder %s115, %s117
    %p124 = scmp.eq.s32.totalorder %s18, 1
    %p125 = por %p123, %p124
    %p126 = scmp.ne.s32.totalorder %s117, %s118
    %p127 = scmp.eq.s32.totalorder %s18, 0
    %p128 = por %p126, %p127
    %p129 = scmp.ne.s32.totalorder %s117, %s118
    %p130 = scmp.eq.s32.totalorder %s19, 1
    %p131 = por %p129, %p130
    %p133 = scmp.ne.s32.totalorder %s118, %s132
    %p134 = scmp.eq.s32.totalorder %s19, 0
    %p135 = por %p133, %p134
    %s137 = sadd.s32 %s136, 1
    %p140 = scmp.eq.s32.totalorder %s13, 1
    %p141 = scmp.ne.s32.totalorder %s136, %s138
    %p142 = scmp.eq.s32.totalorder %s13, 0
    %p143 = por %p141, %p142
    %p144 = scmp.ne.s32.totalorder %s136, %s138
    %p145 = scmp.eq.s32.totalorder %s18, 1
    %p146 = por %p144, %p145
    %p147 = scmp.ne.s32.totalorder %s138, %s139
    %p148 = scmp.eq.s32.totalorder %s18, 0
    %p149 = por %p147, %p148
    %p150 = scmp.ne.s32.totalorder %s138, %s139
    %p151 = scmp.eq.s32.totalorder %s19, 1
    %p152 = por %p150, %p151
    %p154 = scmp.ne.s32.totalorder %s139, %s153
    %p155 = scmp.eq.s32.totalorder %s19, 0
    %p156 = por %p154, %p155
    %s158 = sadd.s32 %s157, 1
    %p161 = scmp.eq.s32.totalorder %s13, 1
    %p162 = scmp.ne.s32.totalorder %s157, %s159
    %p163 = scmp.eq.s32.totalorder %s13, 0
    %p164 = por %p162, %p163
    %p165 = scmp.ne.s32.totalorder %s157, %s159
    %p166 = scmp.eq.s32.totalorder %s18, 1
    %p167 = por %p165, %p166
    %p168 = scmp.ne.s32.totalorder %s159, %s160
    %p169 = scmp.eq.s32.totalorder %s18, 0
    %p170 = por %p168, %p169
    %p171 = scmp.ne.s32.totalorder %s159, %s160
    %p172 = scmp.eq.s32.totalorder %s19, 1
    %p173 = por %p171, %p172
    %p175 = scmp.ne.s32.totalorder %s160, %s174
    %p176 = scmp.eq.s32.totalorder %s19, 0
    %p177 = por %p175, %p176
    %s178 = ssub.s32 %s13, %s20
    %p179 = scmp.eq.s32.totalorder %s178, 0
    %s181 = sadd.s32 %s180, 1
    %s182 = scalar_select %p179, %s180, %s181
    %p185 = pneg %p179
    %p186 = scmp.eq.s32.totalorder %s13, 1
    %p187 = por %p185, %p186
    %p188 = scmp.ne.s32.totalorder %s180, %s183
    %p189 = scmp.eq.s32.totalorder %s13, 0
    %p190 = por %p188, %p189
    %p191 = scmp.ne.s32.totalorder %s180, %s183
    %p192 = scmp.eq.s32.totalorder %s18, 1
    %p193 = por %p191, %p192
    %p194 = scmp.ne.s32.totalorder %s183, %s184
    %p195 = scmp.eq.s32.totalorder %s18, 0
    %p196 = por %p194, %p195
    %p197 = scmp.ne.s32.totalorder %s183, %s184
    %p198 = scmp.eq.s32.totalorder %s19, 1
    %p199 = por %p197, %p198
    %p201 = scmp.ne.s32.totalorder %s184, %s200
    %p202 = scmp.eq.s32.totalorder %s19, 0
    %p203 = por %p201, %p202
    %p204 = scmp.le.s32.totalorder 1, %s13
    %p205 = scmp.lt.s32.totalorder %s13, 3
    %p206 = pnand %p204, %p205
    %p207 = pneg %p206
    // Predicated region
    $region9: #{tclassifier_forward.1} parent=5 // pred_check
      _
    $region10: #{tclassifier_forward.1} parent=5 // pred_check_branch
      %209 = sbr.rel (%p206) target = $region12
    $region11: #{tclassifier_forward.1} parent=5 // pred_region
      %s210 = ssub.s32 %s13, 1
      // Predicated region
      $region13: #{tclassifier_forward.1} parent=11 // pred_check
        %p211 = pneg %p86
      $region14: #{tclassifier_forward.1} parent=11 // pred_check_branch
        %213 = sbr.rel (%p211) target = $region16
      $region15: #{tclassifier_forward.1} parent=11 // pred_region
        _
      $region16: #{tclassifier_forward.1} parent=11 // pred_fallthru
        _
      // Predicated region
      $region17: #{tclassifier_forward.1} parent=11 // pred_check
        %p214 = pneg %p107
      $region18: #{tclassifier_forward.1} parent=11 // pred_check_branch
        %216 = sbr.rel (%p214) target = $region20
      $region19: #{tclassifier_forward.1} parent=11 // pred_region
        _
      $region20: #{tclassifier_forward.1} parent=11 // pred_fallthru
        _
      // Predicated region
      $region21: #{tclassifier_forward.1} parent=11 // pred_check
        %p217 = pneg %p128
      $region22: #{tclassifier_forward.1} parent=11 // pred_check_branch
        %219 = sbr.rel (%p217) target = $region24
      $region23: #{tclassifier_forward.1} parent=11 // pred_region
        _
      $region24: #{tclassifier_forward.1} parent=11 // pred_fallthru
        _
      // Predicated region
      $region25: #{tclassifier_forward.1} parent=11 // pred_check
        %p220 = pneg %p149
      $region26: #{tclassifier_forward.1} parent=11 // pred_check_branch
        %222 = sbr.rel (%p220) target = $region28
      $region27: #{tclassifier_forward.1} parent=11 // pred_region
        _
      $region28: #{tclassifier_forward.1} parent=11 // pred_fallthru
        _
      // Predicated region
      $region29: #{tclassifier_forward.1} parent=11 // pred_check
        %p223 = pneg %p170
      $region30: #{tclassifier_forward.1} parent=11 // pred_check_branch
        %225 = sbr.rel (%p223) target = $region32
      $region31: #{tclassifier_forward.1} parent=11 // pred_region
        _
      $region32: #{tclassifier_forward.1} parent=11 // pred_fallthru
        _
    $region12: #{tclassifier_forward.1} parent=5 // pred_fallthru
      _
    %p226 = scmp.lt.s32.totalorder %s13, 2
    // Predicated region
    $region33: #{tclassifier_forward.1} parent=5 // pred_check
      %p227 = pneg %p226
    $region34: #{tclassifier_forward.1} parent=5 // pred_check_branch
      %229 = sbr.rel (%p227) target = $region36
    $region35: #{tclassifier_forward.1} parent=5 // pred_region
      // Predicated region
      $region37: #{tclassifier_forward.1} parent=35 // pred_check
        %p230 = pneg %p33
      $region38: #{tclassifier_forward.1} parent=35 // pred_check_branch
        %232 = sbr.rel (%p230) target = $region40
      $region39: #{tclassifier_forward.1} parent=35 // pred_region
        %s233 = smul.u32 64, %s13
        %p234 = scmp.lt.s32.totalorder %s233, 127
        %s235 = scalar_select %p234, %s233, 127
        %s236 = smul.addr %s235, 8
        %s237 = scalar_lea.vmem %s0, %s236
        %s238 = smul.u32 64, %s13
      $region40: #{tclassifier_forward.1} parent=35 // pred_fallthru
        _
      // Predicated region
      $region41: #{tclassifier_forward.1} parent=35 // pred_check
        %p239 = pneg %p59
      $region42: #{tclassifier_forward.1} parent=35 // pred_check_branch
        %241 = sbr.rel (%p239) target = $region44
      $region43: #{tclassifier_forward.1} parent=35 // pred_region
        %s242 = smul.u32 64, %s13
        %p243 = scmp.lt.s32.totalorder %s242, 127
        %s244 = scalar_select %p243, %s242, 127
        %s245 = smul.addr %s244, 8
        %s246 = scalar_lea.vmem %s1, %s245
        %s247 = smul.u32 64, %s13
      $region44: #{tclassifier_forward.1} parent=35 // pred_fallthru
        _
    $region36: #{tclassifier_forward.1} parent=5 // pred_fallthru
      _
    %p248 = scmp.le.s32.totalorder 1, %s13
    %p249 = scmp.lt.s32.totalorder %s13, 3
    %p250 = pnand %p248, %p249
    %p251 = pneg %p250
    // Predicated region
    $region45: #{tclassifier_forward.1} parent=5 // pred_check
      _
    $region46: #{tclassifier_forward.1} parent=5 // pred_check_branch
      %253 = sbr.rel (%p250) target = $region48
    $region47: #{tclassifier_forward.1} parent=5 // pred_region
      %s254 = ssub.s32 %s13, 1
      %s255 = smul.u32 64, %s18
      %p256 = scmp.lt.s32.totalorder %s255, 127
      %s257 = scalar_select %p256, %s255, 127
      %s258 = smul.addr %s257, 8
      %s259 = scalar_lea.vmem %s0, %s258
      %p260 = pneg %p39
      %p261 = pneg %p36
      %s262 = smul.u32 64, %s18
      %p263 = scmp.lt.s32.totalorder %s262, 127
      %s264 = scalar_select %p263, %s262, 127
      %s265 = smul.addr %s264, 8
      %s266 = scalar_lea.vmem %s1, %s265
      %p267 = pneg %p65
      %p268 = pneg %p62
      %p269 = pneg %p86
      %p270 = pneg %p83
      %p271 = pneg %p107
      %p272 = pneg %p104
      %p273 = pneg %p128
      %p274 = pneg %p125
      %p275 = pneg %p149
      %p276 = pneg %p146
      %p277 = pneg %p170
      %p278 = pneg %p167
      %p279 = pneg %p196
      %p280 = pneg %p193
      %s281 = smul.u32 64, %s18
      %p282 = scmp.lt.s32.totalorder %s281, 127
      %s283 = scalar_select %p282, %s281, 127
      %s284 = smul.addr %s283, 8
      %s285 = scalar_lea.vmem %s7, %s284
      %s286 = smul.u32 64, %s18
      %p287 = scmp.lt.s32.totalorder %s286, 127
      %s288 = scalar_select %p287, %s286, 127
      %s289 = smul.addr %s288, 8
      %s290 = scalar_lea.vmem %s0, %s289
      %s291 = smul.u32 64, %s18
      %s292 = smul.u32 64, %s18
      %p293 = scmp.lt.s32.totalorder %s292, 127
      %s294 = scalar_select %p293, %s292, 127
      %s295 = smul.addr %s294, 8
      %s296 = scalar_lea.vmem %s1, %s295
      %s297 = smul.u32 64, %s18
      %s298 = smul.u32 64, %s18
      %p299 = scmp.lt.s32.totalorder %s298, 127
      %s300 = scalar_select %p299, %s298, 127
      %s301 = smul.addr %s300, 8
      %s302 = scalar_lea.vmem %s7, %s301
      %s303 = smul.u32 64, %s18
      %v304 = vld [vmem:[%s290] sm:$0xff]
      %v305 = vld [vmem:[%s290 + $0x8] sm:$0xff]
      %v306 = vld [vmem:[%s290 + $0x10] sm:$0xff]
      %v307 = vld [vmem:[%s290 + $0x18] sm:$0xff]
      %v308 = vld [vmem:[%s290 + $0x20] sm:$0xff]
      %v309 = vld [vmem:[%s290 + $0x28] sm:$0xff]
      %v310 = vld [vmem:[%s290 + $0x30] sm:$0xff]
      %v311 = vld [vmem:[%s290 + $0x38] sm:$0xff]
      %v312 = vld [vmem:[%s290 + $0x40] sm:$0xff]
      %v313 = vld [vmem:[%s290 + $0x48] sm:$0xff]
      %v314 = vld [vmem:[%s290 + $0x50] sm:$0xff]
      %v315 = vld [vmem:[%s290 + $0x58] sm:$0xff]
      %v316 = vld [vmem:[%s290 + $0x60] sm:$0xff]
      %v317 = vld [vmem:[%s290 + $0x68] sm:$0xff]
      %v318 = vld [vmem:[%s290 + $0x70] sm:$0xff]
      %v319 = vld [vmem:[%s290 + $0x78] sm:$0xff]
      %v320 = vld [vmem:[%s290 + $0x80] sm:$0xff]
      %v321 = vld [vmem:[%s290 + $0x88] sm:$0xff]
      %v322 = vld [vmem:[%s290 + $0x90] sm:$0xff]
      %v323 = vld [vmem:[%s290 + $0x98] sm:$0xff]
      %v324 = vld [vmem:[%s290 + $0xa0] sm:$0xff]
      %v325 = vld [vmem:[%s290 + $0xa8] sm:$0xff]
      %v326 = vld [vmem:[%s290 + $0xb0] sm:$0xff]
      %v327 = vld [vmem:[%s290 + $0xb8] sm:$0xff]
      %v328 = vld [vmem:[%s290 + $0xc0] sm:$0xff]
      %v329 = vld [vmem:[%s290 + $0xc8] sm:$0xff]
      %v330 = vld [vmem:[%s290 + $0xd0] sm:$0xff]
      %v331 = vld [vmem:[%s290 + $0xd8] sm:$0xff]
      %v332 = vld [vmem:[%s290 + $0xe0] sm:$0xff]
      %v333 = vld [vmem:[%s290 + $0xe8] sm:$0xff]
      %v334 = vld [vmem:[%s290 + $0xf0] sm:$0xff]
      %v335 = vld [vmem:[%s290 + $0xf8] sm:$0xff]
      %v336 = vld [vmem:[%s290 + $0x100] sm:$0xff]
      %v337 = vld [vmem:[%s290 + $0x108] sm:$0xff]
      %v338 = vld [vmem:[%s290 + $0x110] sm:$0xff]
      %v339 = vld [vmem:[%s290 + $0x118] sm:$0xff]
      %v340 = vld [vmem:[%s290 + $0x120] sm:$0xff]
      %v341 = vld [vmem:[%s290 + $0x128] sm:$0xff]
      %v342 = vld [vmem:[%s290 + $0x130] sm:$0xff]
      %v343 = vld [vmem:[%s290 + $0x138] sm:$0xff]
      %v344 = vld [vmem:[%s290 + $0x140] sm:$0xff]
      %v345 = vld [vmem:[%s290 + $0x148] sm:$0xff]
      %v346 = vld [vmem:[%s290 + $0x150] sm:$0xff]
      %v347 = vld [vmem:[%s290 + $0x158] sm:$0xff]
      %v348 = vld [vmem:[%s290 + $0x160] sm:$0xff]
      %v349 = vld [vmem:[%s290 + $0x168] sm:$0xff]
      %v350 = vld [vmem:[%s290 + $0x170] sm:$0xff]
      %v351 = vld [vmem:[%s290 + $0x178] sm:$0xff]
      %v352 = vld [vmem:[%s290 + $0x180] sm:$0xff]
      %v353 = vld [vmem:[%s290 + $0x188] sm:$0xff]
      %v354 = vld [vmem:[%s290 + $0x190] sm:$0xff]
      %v355 = vld [vmem:[%s290 + $0x198] sm:$0xff]
      %v356 = vld [vmem:[%s290 + $0x1a0] sm:$0xff]
      %v357 = vld [vmem:[%s290 + $0x1a8] sm:$0xff]
      %v358 = vld [vmem:[%s290 + $0x1b0] sm:$0xff]
      %v359 = vld [vmem:[%s290 + $0x1b8] sm:$0xff]
      %v360 = vld [vmem:[%s290 + $0x1c0] sm:$0xff]
      %v361 = vld [vmem:[%s290 + $0x1c8] sm:$0xff]
      %v362 = vld [vmem:[%s290 + $0x1d0] sm:$0xff]
      %v363 = vld [vmem:[%s290 + $0x1d8] sm:$0xff]
      %v364 = vld [vmem:[%s290 + $0x1e0] sm:$0xff]
      %v365 = vld [vmem:[%s290 + $0x1e8] sm:$0xff]
      %v366 = vld [vmem:[%s290 + $0x1f0] sm:$0xff]
      %v367 = vld [vmem:[%s290 + $0x1f8] sm:$0xff]
      %v368 = vld [vmem:[%s2] sm:$0xff]
      %v369 = vld [vmem:[%s2 + $0x8] sm:$0xff]
      %v370 = vld [vmem:[%s296] sm:$0xff]
      %v371 = vld [vmem:[%s296 + $0x8] sm:$0xff]
      %v372 = vld [vmem:[%s296 + $0x10] sm:$0xff]
      %v373 = vld [vmem:[%s296 + $0x18] sm:$0xff]
      %v374 = vld [vmem:[%s296 + $0x20] sm:$0xff]
      %v375 = vld [vmem:[%s296 + $0x28] sm:$0xff]
      %v376 = vld [vmem:[%s296 + $0x30] sm:$0xff]
      %v377 = vld [vmem:[%s296 + $0x38] sm:$0xff]
      %v378 = vld [vmem:[%s296 + $0x40] sm:$0xff]
      %v379 = vld [vmem:[%s296 + $0x48] sm:$0xff]
      %v380 = vld [vmem:[%s296 + $0x50] sm:$0xff]
      %v381 = vld [vmem:[%s296 + $0x58] sm:$0xff]
      %v382 = vld [vmem:[%s296 + $0x60] sm:$0xff]
      %v383 = vld [vmem:[%s296 + $0x68] sm:$0xff]
      %v384 = vld [vmem:[%s296 + $0x70] sm:$0xff]
      %v385 = vld [vmem:[%s296 + $0x78] sm:$0xff]
      %v386 = vld [vmem:[%s296 + $0x80] sm:$0xff]
      %v387 = vld [vmem:[%s296 + $0x88] sm:$0xff]
      %v388 = vld [vmem:[%s296 + $0x90] sm:$0xff]
      %v389 = vld [vmem:[%s296 + $0x98] sm:$0xff]
      %v390 = vld [vmem:[%s296 + $0xa0] sm:$0xff]
      %v391 = vld [vmem:[%s296 + $0xa8] sm:$0xff]
      %v392 = vld [vmem:[%s296 + $0xb0] sm:$0xff]
      %v393 = vld [vmem:[%s296 + $0xb8] sm:$0xff]
      %v394 = vld [vmem:[%s296 + $0xc0] sm:$0xff]
      %v395 = vld [vmem:[%s296 + $0xc8] sm:$0xff]
      %v396 = vld [vmem:[%s296 + $0xd0] sm:$0xff]
      %v397 = vld [vmem:[%s296 + $0xd8] sm:$0xff]
      %v398 = vld [vmem:[%s296 + $0xe0] sm:$0xff]
      %v399 = vld [vmem:[%s296 + $0xe8] sm:$0xff]
      %v400 = vld [vmem:[%s296 + $0xf0] sm:$0xff]
      %v401 = vld [vmem:[%s296 + $0xf8] sm:$0xff]
      %v402 = vld [vmem:[%s296 + $0x100] sm:$0xff]
      %v403 = vld [vmem:[%s296 + $0x108] sm:$0xff]
      %v404 = vld [vmem:[%s296 + $0x110] sm:$0xff]
      %v405 = vld [vmem:[%s296 + $0x118] sm:$0xff]
      %v406 = vld [vmem:[%s296 + $0x120] sm:$0xff]
      %v407 = vld [vmem:[%s296 + $0x128] sm:$0xff]
      %v408 = vld [vmem:[%s296 + $0x130] sm:$0xff]
      %v409 = vld [vmem:[%s296 + $0x138] sm:$0xff]
      %v410 = vld [vmem:[%s296 + $0x140] sm:$0xff]
      %v411 = vld [vmem:[%s296 + $0x148] sm:$0xff]
      %v412 = vld [vmem:[%s296 + $0x150] sm:$0xff]
      %v413 = vld [vmem:[%s296 + $0x158] sm:$0xff]
      %v414 = vld [vmem:[%s296 + $0x160] sm:$0xff]
      %v415 = vld [vmem:[%s296 + $0x168] sm:$0xff]
      %v416 = vld [vmem:[%s296 + $0x170] sm:$0xff]
      %v417 = vld [vmem:[%s296 + $0x178] sm:$0xff]
      %v418 = vld [vmem:[%s296 + $0x180] sm:$0xff]
      %v419 = vld [vmem:[%s296 + $0x188] sm:$0xff]
      %v420 = vld [vmem:[%s296 + $0x190] sm:$0xff]
      %v421 = vld [vmem:[%s296 + $0x198] sm:$0xff]
      %v422 = vld [vmem:[%s296 + $0x1a0] sm:$0xff]
      %v423 = vld [vmem:[%s296 + $0x1a8] sm:$0xff]
      %v424 = vld [vmem:[%s296 + $0x1b0] sm:$0xff]
      %v425 = vld [vmem:[%s296 + $0x1b8] sm:$0xff]
      %v426 = vld [vmem:[%s296 + $0x1c0] sm:$0xff]
      %v427 = vld [vmem:[%s296 + $0x1c8] sm:$0xff]
      %v428 = vld [vmem:[%s296 + $0x1d0] sm:$0xff]
      %v429 = vld [vmem:[%s296 + $0x1d8] sm:$0xff]
      %v430 = vld [vmem:[%s296 + $0x1e0] sm:$0xff]
      %v431 = vld [vmem:[%s296 + $0x1e8] sm:$0xff]
      %v432 = vld [vmem:[%s296 + $0x1f0] sm:$0xff]
      %v433 = vld [vmem:[%s296 + $0x1f8] sm:$0xff]
      %v434 = vld [vmem:[%s3] sm:$0x3f]
      %vm435 = vcmask 48128
      %v437 = vsel %vm435, %v370, 0
      %v440 = vsel %vm435, %v371, 0
      %v443 = vsel %vm435, %v372, 0
      %v446 = vsel %vm435, %v373, 0
      %v449 = vsel %vm435, %v374, 0
      %v452 = vsel %vm435, %v375, 0
      %v455 = vsel %vm435, %v376, 0
      %v458 = vsel %vm435, %v377, 0
      %v461 = vsel %vm435, %v378, 0
      %v464 = vsel %vm435, %v379, 0
      %v467 = vsel %vm435, %v380, 0
      %v470 = vsel %vm435, %v381, 0
      %v473 = vsel %vm435, %v382, 0
      %v476 = vsel %vm435, %v383, 0
      %v479 = vsel %vm435, %v384, 0
      %v482 = vsel %vm435, %v385, 0
      %v485 = vsel %vm435, %v386, 0
      %v488 = vsel %vm435, %v387, 0
      %v491 = vsel %vm435, %v388, 0
      %v494 = vsel %vm435, %v389, 0
      %v497 = vsel %vm435, %v390, 0
      %v500 = vsel %vm435, %v391, 0
      %v503 = vsel %vm435, %v392, 0
      %v506 = vsel %vm435, %v393, 0
      %v509 = vsel %vm435, %v394, 0
      %v512 = vsel %vm435, %v395, 0
      %v515 = vsel %vm435, %v396, 0
      %v518 = vsel %vm435, %v397, 0
      %v521 = vsel %vm435, %v398, 0
      %v524 = vsel %vm435, %v399, 0
      %v527 = vsel %vm435, %v400, 0
      %v530 = vsel %vm435, %v401, 0
      %v533 = vsel %vm435, %v402, 0
      %v536 = vsel %vm435, %v403, 0
      %v539 = vsel %vm435, %v404, 0
      %v542 = vsel %vm435, %v405, 0
      %v545 = vsel %vm435, %v406, 0
      %v548 = vsel %vm435, %v407, 0
      %v551 = vsel %vm435, %v408, 0
      %v554 = vsel %vm435, %v409, 0
      %v557 = vsel %vm435, %v410, 0
      %v560 = vsel %vm435, %v411, 0
      %v563 = vsel %vm435, %v412, 0
      %v566 = vsel %vm435, %v413, 0
      %v569 = vsel %vm435, %v414, 0
      %v572 = vsel %vm435, %v415, 0
      %v575 = vsel %vm435, %v416, 0
      %v578 = vsel %vm435, %v417, 0
      %v581 = vsel %vm435, %v418, 0
      %v584 = vsel %vm435, %v419, 0
      %v587 = vsel %vm435, %v420, 0
      %v590 = vsel %vm435, %v421, 0
      %v593 = vsel %vm435, %v422, 0
      %v596 = vsel %vm435, %v423, 0
      %v599 = vsel %vm435, %v424, 0
      %v602 = vsel %vm435, %v425, 0
      %v605 = vsel %vm435, %v426, 0
      %v608 = vsel %vm435, %v427, 0
      %v611 = vsel %vm435, %v428, 0
      %v614 = vsel %vm435, %v429, 0
      %v617 = vsel %vm435, %v430, 0
      %v620 = vsel %vm435, %v431, 0
      %v623 = vsel %vm435, %v432, 0
      %v626 = vsel %vm435, %v433, 0
      %vm628 = vcmask 1045504
      %v630 = vsel %vm628, %v434, 0
      %632 = vmatprep.subr.mxu0 0.0
      %633 = vmatpush1.msra.mxu0 %v630
      %634 = vmatprep.subr.mxu0 0.0
      %635 = vmatpush1.msra.mxu0 0.0
      %636 = vmatprep.subr.mxu0 0.0
      %637 = vmatpush1.msra.mxu0 0.0
      %638 = vmatprep.subr.mxu0 0.0
      %639 = vmatpush1.msra.mxu0 0.0
      %640 = vmatprep.subr.mxu0 0.0
      %641 = vmatpush1.msra.mxu0 0.0
      %642 = vmatprep.subr.mxu0 0.0
      %643 = vmatpush1.msra.mxu0 0.0
      %644 = vmatprep.subr.mxu0 0.0
      %645 = vmatpush1.msra.mxu0 0.0
      %646 = vmatprep.subr.mxu0 0.0
      %647 = vmatpush1.msra.mxu0 0.0
      %648 = vmatprep.subr.mxu0 0.0
      %649 = vmatpush1.msra.mxu0 0.0
      %650 = vmatprep.subr.mxu0 0.0
      %651 = vmatpush1.msra.mxu0 0.0
      %652 = vmatprep.subr.mxu0 0.0
      %653 = vmatpush1.msra.mxu0 0.0
      %654 = vmatprep.subr.mxu0 0.0
      %655 = vmatpush1.msra.mxu0 0.0
      %656 = vmatprep.subr.mxu0 0.0
      %657 = vmatpush1.msra.mxu0 0.0
      %658 = vmatprep.subr.mxu0 0.0
      %659 = vmatpush1.msra.mxu0 0.0
      %660 = vmatprep.subr.mxu0 0.0
      %661 = vmatpush1.msra.mxu0 0.0
      %662 = vmatprep.subr.mxu0 0.0
      %663 = vmatpush1.msra.mxu0 0.0
      %664 = vmatprep.subr.mxu0 0.0
      %665 = vmatpush1.msra.mxu0 0.0
      %666 = vmatprep.subr.mxu0 0.0
      %667 = vmatpush1.msra.mxu0 0.0
      %668 = vmatprep.subr.mxu0 0.0
      %669 = vmatpush1.msra.mxu0 0.0
      %670 = vmatprep.subr.mxu0 0.0
      %671 = vmatpush1.msra.mxu0 0.0
      %672 = vmatprep.subr.mxu0 0.0
      %673 = vmatpush1.msra.mxu0 0.0
      %674 = vmatprep.subr.mxu0 0.0
      %675 = vmatpush1.msra.mxu0 0.0
      %676 = vmatprep.subr.mxu0 0.0
      %677 = vmatpush1.msra.mxu0 0.0
      %678 = vmatprep.subr.mxu0 0.0
      %679 = vmatpush1.msra.mxu0 0.0
      %680 = vmatprep.subr.mxu0 0.0
      %681 = vmatpush1.msra.mxu0 0.0
      %682 = vmatprep.subr.mxu0 0.0
      %683 = vmatpush1.msra.mxu0 0.0
      %684 = vmatprep.subr.mxu0 0.0
      %685 = vmatpush1.msra.mxu0 0.0
      %686 = vmatprep.subr.mxu0 0.0
      %687 = vmatpush1.msra.mxu0 0.0
      %688 = vmatprep.subr.mxu0 0.0
      %689 = vmatpush1.msra.mxu0 0.0
      %690 = vmatprep.subr.mxu0 0.0
      %691 = vmatpush1.msra.mxu0 0.0
      %692 = vmatprep.subr.mxu0 0.0
      %693 = vmatpush1.msra.mxu0 0.0
      %694 = vmatprep.subr.mxu0 0.0
      %695 = vmatpush1.msra.mxu0 0.0
      %696 = vmatprep.mubr.f32.mxu0 0.0
      %697 = vmatmul.mubr.f32.gmra.mrb[0].mxu0 %v437
      %v698 = vpop.f32.mrb[0].mxu0
      %v699 = vadd.f32 0.0, %v698
      %v700 = vpop.f32.mrb[0].mxu0
      %701 = vmatprep.mubr.f32.mxu0 0.0
      %702 = vmatmul.mubr.f32.gmra.mrb[0].mxu0 %v440
      %v703 = vpop.f32.mrb[0].mxu0
      %v704 = vadd.f32 0.0, %v703
      %v705 = vpop.f32.mrb[0].mxu0
      %706 = vmatprep.mubr.f32.mxu0 0.0
      %707 = vmatmul.mubr.f32.gmra.mrb[0].mxu0 %v443
      %v708 = vpop.f32.mrb[0].mxu0
      %v709 = vadd.f32 0.0, %v708
      %v710 = vpop.f32.mrb[0].mxu0
      %711 = vmatprep.mubr.f32.mxu0 0.0
      %712 = vmatmul.mubr.f32.gmra.mrb[0].mxu0 %v446
      %v713 = vpop.f32.mrb[0].mxu0
      %v714 = vadd.f32 0.0, %v713
      %v715 = vpop.f32.mrb[0].mxu0
      %716 = vmatprep.mubr.f32.mxu0 0.0
      %717 = vmatmul.mubr.f32.gmra.mrb[0].mxu0 %v449
      %v718 = vpop.f32.mrb[0].mxu0
      %v719 = vadd.f32 0.0, %v718
      %v720 = vpop.f32.mrb[0].mxu0
      %721 = vmatprep.mubr.f32.mxu0 0.0
      %722 = vmatmul.mubr.f32.gmra.mrb[0].mxu0 %v452
      %v723 = vpop.f32.mrb[0].mxu0
      %v724 = vadd.f32 0.0, %v723
      %v725 = vpop.f32.mrb[0].mxu0
      %726 = vmatprep.mubr.f32.mxu0 0.0
      %727 = vmatmul.mubr.f32.gmra.mrb[0].mxu0 %v455
      %v728 = vpop.f32.mrb[0].mxu0
      %v729 = vadd.f32 0.0, %v728
      %v730 = vpop.f32.mrb[0].mxu0
      %731 = vmatprep.mubr.f32.mxu0 0.0
      %732 = vmatmul.mubr.f32.gmra.mrb[0].mxu0 %v458
      %v733 = vpop.f32.mrb[0].mxu0
      %v734 = vadd.f32 0.0, %v733
      %v735 = vpop.f32.mrb[0].mxu0
      %736 = vmatprep.mubr.f32.mxu0 0.0
      %737 = vmatmul.mubr.f32.gmra.mrb[0].mxu0 %v461
      %v738 = vpop.f32.mrb[0].mxu0
      %v739 = vadd.f32 0.0, %v738
      %v740 = vpop.f32.mrb[0].mxu0
      %741 = vmatprep.mubr.f32.mxu0 0.0
      %742 = vmatmul.mubr.f32.gmra.mrb[0].mxu0 %v464
      %v743 = vpop.f32.mrb[0].mxu0
      %v744 = vadd.f32 0.0, %v743
      %v745 = vpop.f32.mrb[0].mxu0
      %746 = vmatprep.mubr.f32.mxu0 0.0
      %747 = vmatmul.mubr.f32.gmra.mrb[0].mxu0 %v467
      %v748 = vpop.f32.mrb[0].mxu0
      %v749 = vadd.f32 0.0, %v748
      %v750 = vpop.f32.mrb[0].mxu0
      %751 = vmatprep.mubr.f32.mxu0 0.0
      %752 = vmatmul.mubr.f32.gmra.mrb[0].mxu0 %v470
      %v753 = vpop.f32.mrb[0].mxu0
      %v754 = vadd.f32 0.0, %v753
      %v755 = vpop.f32.mrb[0].mxu0
      %756 = vmatprep.mubr.f32.mxu0 0.0
      %757 = vmatmul.mubr.f32.gmra.mrb[0].mxu0 %v473
      %v758 = vpop.f32.mrb[0].mxu0
      %v759 = vadd.f32 0.0, %v758
      %v760 = vpop.f32.mrb[0].mxu0
      %761 = vmatprep.mubr.f32.mxu0 0.0
      %762 = vmatmul.mubr.f32.gmra.mrb[0].mxu0 %v476
      %v763 = vpop.f32.mrb[0].mxu0
      %v764 = vadd.f32 0.0, %v763
      %v765 = vpop.f32.mrb[0].mxu0
      %766 = vmatprep.mubr.f32.mxu0 0.0
      %767 = vmatmul.mubr.f32.gmra.mrb[0].mxu0 %v479
      %v768 = vpop.f32.mrb[0].mxu0
      %v769 = vadd.f32 0.0, %v768
      %v770 = vpop.f32.mrb[0].mxu0
      %771 = vmatprep.mubr.f32.mxu0 0.0
      %772 = vmatmul.mubr.f32.gmra.mrb[0].mxu0 %v482
      %v773 = vpop.f32.mrb[0].mxu0
      %v774 = vadd.f32 0.0, %v773
      %v775 = vpop.f32.mrb[0].mxu0
      %776 = vmatprep.mubr.f32.mxu0 0.0
      %777 = vmatmul.mubr.f32.gmra.mrb[0].mxu0 %v485
      %v778 = vpop.f32.mrb[0].mxu0
      %v779 = vadd.f32 0.0, %v778
      %v780 = vpop.f32.mrb[0].mxu0
      %781 = vmatprep.mubr.f32.mxu0 0.0
      %782 = vmatmul.mubr.f32.gmra.mrb[0].mxu0 %v488
      %v783 = vpop.f32.mrb[0].mxu0
      %v784 = vadd.f32 0.0, %v783
      %v785 = vpop.f32.mrb[0].mxu0
      %786 = vmatprep.mubr.f32.mxu0 0.0
      %787 = vmatmul.mubr.f32.gmra.mrb[0].mxu0 %v491
      %v788 = vpop.f32.mrb[0].mxu0
      %v789 = vadd.f32 0.0, %v788
      %v790 = vpop.f32.mrb[0].mxu0
      %791 = vmatprep.mubr.f32.mxu0 0.0
      %792 = vmatmul.mubr.f32.gmra.mrb[0].mxu0 %v494
      %v793 = vpop.f32.mrb[0].mxu0
      %v794 = vadd.f32 0.0, %v793
      %v795 = vpop.f32.mrb[0].mxu0
      %796 = vmatprep.mubr.f32.mxu0 0.0
      %797 = vmatmul.mubr.f32.gmra.mrb[0].mxu0 %v497
      %v798 = vpop.f32.mrb[0].mxu0
      %v799 = vadd.f32 0.0, %v798
      %v800 = vpop.f32.mrb[0].mxu0
      %801 = vmatprep.mubr.f32.mxu0 0.0
      %802 = vmatmul.mubr.f32.gmra.mrb[0].mxu0 %v500
      %v803 = vpop.f32.mrb[0].mxu0
      %v804 = vadd.f32 0.0, %v803
      %v805 = vpop.f32.mrb[0].mxu0
      %806 = vmatprep.mubr.f32.mxu0 0.0
      %807 = vmatmul.mubr.f32.gmra.mrb[0].mxu0 %v503
      %v808 = vpop.f32.mrb[0].mxu0
      %v809 = vadd.f32 0.0, %v808
      %v810 = vpop.f32.mrb[0].mxu0
      %811 = vmatprep.mubr.f32.mxu0 0.0
      %812 = vmatmul.mubr.f32.gmra.mrb[0].mxu0 %v506
      %v813 = vpop.f32.mrb[0].mxu0
      %v814 = vadd.f32 0.0, %v813
      %v815 = vpop.f32.mrb[0].mxu0
      %816 = vmatprep.mubr.f32.mxu0 0.0
      %817 = vmatmul.mubr.f32.gmra.mrb[0].mxu0 %v509
      %v818 = vpop.f32.mrb[0].mxu0
      %v819 = vadd.f32 0.0, %v818
      %v820 = vpop.f32.mrb[0].mxu0
      %821 = vmatprep.mubr.f32.mxu0 0.0
      %822 = vmatmul.mubr.f32.gmra.mrb[0].mxu0 %v512
      %v823 = vpop.f32.mrb[0].mxu0
      %v824 = vadd.f32 0.0, %v823
      %v825 = vpop.f32.mrb[0].mxu0
      %826 = vmatprep.mubr.f32.mxu0 0.0
      %827 = vmatmul.mubr.f32.gmra.mrb[0].mxu0 %v515
      %v828 = vpop.f32.mrb[0].mxu0
      %v829 = vadd.f32 0.0, %v828
      %v830 = vpop.f32.mrb[0].mxu0
      %831 = vmatprep.mubr.f32.mxu0 0.0
      %832 = vmatmul.mubr.f32.gmra.mrb[0].mxu0 %v518
      %v833 = vpop.f32.mrb[0].mxu0
      %v834 = vadd.f32 0.0, %v833
      %v835 = vpop.f32.mrb[0].mxu0
      %836 = vmatprep.mubr.f32.mxu0 0.0
      %837 = vmatmul.mubr.f32.gmra.mrb[0].mxu0 %v521
      %v838 = vpop.f32.mrb[0].mxu0
      %v839 = vadd.f32 0.0, %v838
      %v840 = vpop.f32.mrb[0].mxu0
      %841 = vmatprep.mubr.f32.mxu0 0.0
      %842 = vmatmul.mubr.f32.gmra.mrb[0].mxu0 %v524
      %v843 = vpop.f32.mrb[0].mxu0
      %v844 = vadd.f32 0.0, %v843
      %v845 = vpop.f32.mrb[0].mxu0
      %846 = vmatprep.mubr.f32.mxu0 0.0
      %847 = vmatmul.mubr.f32.gmra.mrb[0].mxu0 %v527
      %v848 = vpop.f32.mrb[0].mxu0
      %v849 = vadd.f32 0.0, %v848
      %v850 = vpop.f32.mrb[0].mxu0
      %851 = vmatprep.mubr.f32.mxu0 0.0
      %852 = vmatmul.mubr.f32.gmra.mrb[0].mxu0 %v530
      %v853 = vpop.f32.mrb[0].mxu0
      %v854 = vadd.f32 0.0, %v853
      %v855 = vpop.f32.mrb[0].mxu0
      %856 = vmatprep.mubr.f32.mxu0 0.0
      %857 = vmatmul.mubr.f32.gmra.mrb[0].mxu0 %v533
      %v858 = vpop.f32.mrb[0].mxu0
      %v859 = vadd.f32 0.0, %v858
      %v860 = vpop.f32.mrb[0].mxu0
      %861 = vmatprep.mubr.f32.mxu0 0.0
      %862 = vmatmul.mubr.f32.gmra.mrb[0].mxu0 %v536
      %v863 = vpop.f32.mrb[0].mxu0
      %v864 = vadd.f32 0.0, %v863
      %v865 = vpop.f32.mrb[0].mxu0
      %866 = vmatprep.mubr.f32.mxu0 0.0
      %867 = vmatmul.mubr.f32.gmra.mrb[0].mxu0 %v539
      %v868 = vpop.f32.mrb[0].mxu0
      %v869 = vadd.f32 0.0, %v868
      %v870 = vpop.f32.mrb[0].mxu0
      %871 = vmatprep.mubr.f32.mxu0 0.0
      %872 = vmatmul.mubr.f32.gmra.mrb[0].mxu0 %v542
      %v873 = vpop.f32.mrb[0].mxu0
      %v874 = vadd.f32 0.0, %v873
      %v875 = vpop.f32.mrb[0].mxu0
      %876 = vmatprep.mubr.f32.mxu0 0.0
      %877 = vmatmul.mubr.f32.gmra.mrb[0].mxu0 %v545
      %v878 = vpop.f32.mrb[0].mxu0
      %v879 = vadd.f32 0.0, %v878
      %v880 = vpop.f32.mrb[0].mxu0
      %881 = vmatprep.mubr.f32.mxu0 0.0
      %882 = vmatmul.mubr.f32.gmra.mrb[0].mxu0 %v548
      %v883 = vpop.f32.mrb[0].mxu0
      %v884 = vadd.f32 0.0, %v883
      %v885 = vpop.f32.mrb[0].mxu0
      %886 = vmatprep.mubr.f32.mxu0 0.0
      %887 = vmatmul.mubr.f32.gmra.mrb[0].mxu0 %v551
      %v888 = vpop.f32.mrb[0].mxu0
      %v889 = vadd.f32 0.0, %v888
      %v890 = vpop.f32.mrb[0].mxu0
      %891 = vmatprep.mubr.f32.mxu0 0.0
      %892 = vmatmul.mubr.f32.gmra.mrb[0].mxu0 %v554
      %v893 = vpop.f32.mrb[0].mxu0
      %v894 = vadd.f32 0.0, %v893
      %v895 = vpop.f32.mrb[0].mxu0
      %896 = vmatprep.mubr.f32.mxu0 0.0
      %897 = vmatmul.mubr.f32.gmra.mrb[0].mxu0 %v557
      %v898 = vpop.f32.mrb[0].mxu0
      %v899 = vadd.f32 0.0, %v898
      %v900 = vpop.f32.mrb[0].mxu0
      %901 = vmatprep.mubr.f32.mxu0 0.0
      %902 = vmatmul.mubr.f32.gmra.mrb[0].mxu0 %v560
      %v903 = vpop.f32.mrb[0].mxu0
      %v904 = vadd.f32 0.0, %v903
      %v905 = vpop.f32.mrb[0].mxu0
      %906 = vmatprep.mubr.f32.mxu0 0.0
      %907 = vmatmul.mubr.f32.gmra.mrb[0].mxu0 %v563
      %v908 = vpop.f32.mrb[0].mxu0
      %v909 = vadd.f32 0.0, %v908
      %v910 = vpop.f32.mrb[0].mxu0
      %911 = vmatprep.mubr.f32.mxu0 0.0
      %912 = vmatmul.mubr.f32.gmra.mrb[0].mxu0 %v566
      %v913 = vpop.f32.mrb[0].mxu0
      %v914 = vadd.f32 0.0, %v913
      %v915 = vpop.f32.mrb[0].mxu0
      %916 = vmatprep.mubr.f32.mxu0 0.0
      %917 = vmatmul.mubr.f32.gmra.mrb[0].mxu0 %v569
      %v918 = vpop.f32.mrb[0].mxu0
      %v919 = vadd.f32 0.0, %v918
      %v920 = vpop.f32.mrb[0].mxu0
      %921 = vmatprep.mubr.f32.mxu0 0.0
      %922 = vmatmul.mubr.f32.gmra.mrb[0].mxu0 %v572
      %v923 = vpop.f32.mrb[0].mxu0
      %v924 = vadd.f32 0.0, %v923
      %v925 = vpop.f32.mrb[0].mxu0
      %926 = vmatprep.mubr.f32.mxu0 0.0
      %927 = vmatmul.mubr.f32.gmra.mrb[0].mxu0 %v575
      %v928 = vpop.f32.mrb[0].mxu0
      %v929 = vadd.f32 0.0, %v928
      %v930 = vpop.f32.mrb[0].mxu0
      %931 = vmatprep.mubr.f32.mxu0 0.0
      %932 = vmatmul.mubr.f32.gmra.mrb[0].mxu0 %v578
      %v933 = vpop.f32.mrb[0].mxu0
      %v934 = vadd.f32 0.0, %v933
      %v935 = vpop.f32.mrb[0].mxu0
      %936 = vmatprep.mubr.f32.mxu0 0.0
      %937 = vmatmul.mubr.f32.gmra.mrb[0].mxu0 %v581
      %v938 = vpop.f32.mrb[0].mxu0
      %v939 = vadd.f32 0.0, %v938
      %v940 = vpop.f32.mrb[0].mxu0
      %941 = vmatprep.mubr.f32.mxu0 0.0
      %942 = vmatmul.mubr.f32.gmra.mrb[0].mxu0 %v584
      %v943 = vpop.f32.mrb[0].mxu0
      %v944 = vadd.f32 0.0, %v943
      %v945 = vpop.f32.mrb[0].mxu0
      %946 = vmatprep.mubr.f32.mxu0 0.0
      %947 = vmatmul.mubr.f32.gmra.mrb[0].mxu0 %v587
      %v948 = vpop.f32.mrb[0].mxu0
      %v949 = vadd.f32 0.0, %v948
      %v950 = vpop.f32.mrb[0].mxu0
      %951 = vmatprep.mubr.f32.mxu0 0.0
      %952 = vmatmul.mubr.f32.gmra.mrb[0].mxu0 %v590
      %v953 = vpop.f32.mrb[0].mxu0
      %v954 = vadd.f32 0.0, %v953
      %v955 = vpop.f32.mrb[0].mxu0
      %956 = vmatprep.mubr.f32.mxu0 0.0
      %957 = vmatmul.mubr.f32.gmra.mrb[0].mxu0 %v593
      %v958 = vpop.f32.mrb[0].mxu0
      %v959 = vadd.f32 0.0, %v958
      %v960 = vpop.f32.mrb[0].mxu0
      %961 = vmatprep.mubr.f32.mxu0 0.0
      %962 = vmatmul.mubr.f32.gmra.mrb[0].mxu0 %v596
      %v963 = vpop.f32.mrb[0].mxu0
      %v964 = vadd.f32 0.0, %v963
      %v965 = vpop.f32.mrb[0].mxu0
      %966 = vmatprep.mubr.f32.mxu0 0.0
      %967 = vmatmul.mubr.f32.gmra.mrb[0].mxu0 %v599
      %v968 = vpop.f32.mrb[0].mxu0
      %v969 = vadd.f32 0.0, %v968
      %v970 = vpop.f32.mrb[0].mxu0
      %971 = vmatprep.mubr.f32.mxu0 0.0
      %972 = vmatmul.mubr.f32.gmra.mrb[0].mxu0 %v602
      %v973 = vpop.f32.mrb[0].mxu0
      %v974 = vadd.f32 0.0, %v973
      %v975 = vpop.f32.mrb[0].mxu0
      %976 = vmatprep.mubr.f32.mxu0 0.0
      %977 = vmatmul.mubr.f32.gmra.mrb[0].mxu0 %v605
      %v978 = vpop.f32.mrb[0].mxu0
      %v979 = vadd.f32 0.0, %v978
      %v980 = vpop.f32.mrb[0].mxu0
      %981 = vmatprep.mubr.f32.mxu0 0.0
      %982 = vmatmul.mubr.f32.gmra.mrb[0].mxu0 %v608
      %v983 = vpop.f32.mrb[0].mxu0
      %v984 = vadd.f32 0.0, %v983
      %v985 = vpop.f32.mrb[0].mxu0
      %986 = vmatprep.mubr.f32.mxu0 0.0
      %987 = vmatmul.mubr.f32.gmra.mrb[0].mxu0 %v611
      %v988 = vpop.f32.mrb[0].mxu0
      %v989 = vadd.f32 0.0, %v988
      %v990 = vpop.f32.mrb[0].mxu0
      %991 = vmatprep.mubr.f32.mxu0 0.0
      %992 = vmatmul.mubr.f32.gmra.mrb[0].mxu0 %v614
      %v993 = vpop.f32.mrb[0].mxu0
      %v994 = vadd.f32 0.0, %v993
      %v995 = vpop.f32.mrb[0].mxu0
      %996 = vmatprep.mubr.f32.mxu0 0.0
      %997 = vmatmul.mubr.f32.gmra.mrb[0].mxu0 %v617
      %v998 = vpop.f32.mrb[0].mxu0
      %v999 = vadd.f32 0.0, %v998
      %v1000 = vpop.f32.mrb[0].mxu0
      %1001 = vmatprep.mubr.f32.mxu0 0.0
      %1002 = vmatmul.mubr.f32.gmra.mrb[0].mxu0 %v620
      %v1003 = vpop.f32.mrb[0].mxu0
      %v1004 = vadd.f32 0.0, %v1003
      %v1005 = vpop.f32.mrb[0].mxu0
      %1006 = vmatprep.mubr.f32.mxu0 0.0
      %1007 = vmatmul.mubr.f32.gmra.mrb[0].mxu0 %v623
      %v1008 = vpop.f32.mrb[0].mxu0
      %v1009 = vadd.f32 0.0, %v1008
      %v1010 = vpop.f32.mrb[0].mxu0
      %1011 = vmatprep.mubr.f32.mxu0 0.0
      %1012 = vmatmul.mubr.f32.gmra.mrb[0].mxu0 %v626
      %v1013 = vpop.f32.mrb[0].mxu0
      %v1014 = vadd.f32 0.0, %v1013
      %v1015 = vpop.f32.mrb[0].mxu0
      %1016 = vdwg.mxu0
      %vm1017 = vcmask 130048
      %v1019 = vsel %vm1017, %v304, 0
      %v1022 = vsel %vm1017, %v305, 0
      %v1025 = vsel %vm1017, %v306, 0
      %v1028 = vsel %vm1017, %v307, 0
      %v1031 = vsel %vm1017, %v308, 0
      %v1034 = vsel %vm1017, %v309, 0
      %v1037 = vsel %vm1017, %v310, 0
      %v1040 = vsel %vm1017, %v311, 0
      %v1043 = vsel %vm1017, %v312, 0
      %v1046 = vsel %vm1017, %v313, 0
      %v1049 = vsel %vm1017, %v314, 0
      %v1052 = vsel %vm1017, %v315, 0
      %v1055 = vsel %vm1017, %v316, 0
      %v1058 = vsel %vm1017, %v317, 0
      %v1061 = vsel %vm1017, %v318, 0
      %v1064 = vsel %vm1017, %v319, 0
      %v1067 = vsel %vm1017, %v320, 0
      %v1070 = vsel %vm1017, %v321, 0
      %v1073 = vsel %vm1017, %v322, 0
      %v1076 = vsel %vm1017, %v323, 0
      %v1079 = vsel %vm1017, %v324, 0
      %v1082 = vsel %vm1017, %v325, 0
      %v1085 = vsel %vm1017, %v326, 0
      %v1088 = vsel %vm1017, %v327, 0
      %v1091 = vsel %vm1017, %v328, 0
      %v1094 = vsel %vm1017, %v329, 0
      %v1097 = vsel %vm1017, %v330, 0
      %v1100 = vsel %vm1017, %v331, 0
      %v1103 = vsel %vm1017, %v332, 0
      %v1106 = vsel %vm1017, %v333, 0
      %v1109 = vsel %vm1017, %v334, 0
      %v1112 = vsel %vm1017, %v335, 0
      %v1115 = vsel %vm1017, %v336, 0
      %v1118 = vsel %vm1017, %v337, 0
      %v1121 = vsel %vm1017, %v338, 0
      %v1124 = vsel %vm1017, %v339, 0
      %v1127 = vsel %vm1017, %v340, 0
      %v1130 = vsel %vm1017, %v341, 0
      %v1133 = vsel %vm1017, %v342, 0
      %v1136 = vsel %vm1017, %v343, 0
      %v1139 = vsel %vm1017, %v344, 0
      %v1142 = vsel %vm1017, %v345, 0
      %v1145 = vsel %vm1017, %v346, 0
      %v1148 = vsel %vm1017, %v347, 0
      %v1151 = vsel %vm1017, %v348, 0
      %v1154 = vsel %vm1017, %v349, 0
      %v1157 = vsel %vm1017, %v350, 0
      %v1160 = vsel %vm1017, %v351, 0
      %v1163 = vsel %vm1017, %v352, 0
      %v1166 = vsel %vm1017, %v353, 0
      %v1169 = vsel %vm1017, %v354, 0
      %v1172 = vsel %vm1017, %v355, 0
      %v1175 = vsel %vm1017, %v356, 0
      %v1178 = vsel %vm1017, %v357, 0
      %v1181 = vsel %vm1017, %v358, 0
      %v1184 = vsel %vm1017, %v359, 0
      %v1187 = vsel %vm1017, %v360, 0
      %v1190 = vsel %vm1017, %v361, 0
      %v1193 = vsel %vm1017, %v362, 0
      %v1196 = vsel %vm1017, %v363, 0
      %v1199 = vsel %vm1017, %v364, 0
      %v1202 = vsel %vm1017, %v365, 0
      %v1205 = vsel %vm1017, %v366, 0
      %v1208 = vsel %vm1017, %v367, 0
      %1210 = vmatprep.subr.mxu0 0.0
      %1211 = vmatpush1.msra.mxu0 %v368
      %1212 = vmatprep.subr.mxu0 0.0
      %1213 = vmatpush1.msra.mxu0 %v369
      %1214 = vmatprep.subr.mxu0 0.0
      %1215 = vmatpush1.msra.mxu0 0.0
      %1216 = vmatprep.subr.mxu0 0.0
      %1217 = vmatpush1.msra.mxu0 0.0
      %1218 = vmatprep.subr.mxu0 0.0
      %1219 = vmatpush1.msra.mxu0 0.0
      %1220 = vmatprep.subr.mxu0 0.0
      %1221 = vmatpush1.msra.mxu0 0.0
      %1222 = vmatprep.subr.mxu0 0.0
      %1223 = vmatpush1.msra.mxu0 0.0
      %1224 = vmatprep.subr.mxu0 0.0
      %1225 = vmatpush1.msra.mxu0 0.0
      %1226 = vmatprep.subr.mxu0 0.0
      %1227 = vmatpush1.msra.mxu0 0.0
      %1228 = vmatprep.subr.mxu0 0.0
      %1229 = vmatpush1.msra.mxu0 0.0
      %1230 = vmatprep.subr.mxu0 0.0
      %1231 = vmatpush1.msra.mxu0 0.0
      %1232 = vmatprep.subr.mxu0 0.0
      %1233 = vmatpush1.msra.mxu0 0.0
      %1234 = vmatprep.subr.mxu0 0.0
      %1235 = vmatpush1.msra.mxu0 0.0
      %1236 = vmatprep.subr.mxu0 0.0
      %1237 = vmatpush1.msra.mxu0 0.0
      %1238 = vmatprep.subr.mxu0 0.0
      %1239 = vmatpush1.msra.mxu0 0.0
      %1240 = vmatprep.subr.mxu0 0.0
      %1241 = vmatpush1.msra.mxu0 0.0
      %1242 = vmatprep.subr.mxu0 0.0
      %1243 = vmatpush1.msra.mxu0 0.0
      %1244 = vmatprep.subr.mxu0 0.0
      %1245 = vmatpush1.msra.mxu0 0.0
      %1246 = vmatprep.subr.mxu0 0.0
      %1247 = vmatpush1.msra.mxu0 0.0
      %1248 = vmatprep.subr.mxu0 0.0
      %1249 = vmatpush1.msra.mxu0 0.0
      %1250 = vmatprep.subr.mxu0 0.0
      %1251 = vmatpush1.msra.mxu0 0.0
      %1252 = vmatprep.subr.mxu0 0.0
      %1253 = vmatpush1.msra.mxu0 0.0
      %1254 = vmatprep.subr.mxu0 0.0
      %1255 = vmatpush1.msra.mxu0 0.0
      %1256 = vmatprep.subr.mxu0 0.0
      %1257 = vmatpush1.msra.mxu0 0.0
      %1258 = vmatprep.subr.mxu0 0.0
      %1259 = vmatpush1.msra.mxu0 0.0
      %1260 = vmatprep.subr.mxu0 0.0
      %1261 = vmatpush1.msra.mxu0 0.0
      %1262 = vmatprep.subr.mxu0 0.0
      %1263 = vmatpush1.msra.mxu0 0.0
      %1264 = vmatprep.subr.mxu0 0.0
      %1265 = vmatpush1.msra.mxu0 0.0
      %1266 = vmatprep.subr.mxu0 0.0
      %1267 = vmatpush1.msra.mxu0 0.0
      %1268 = vmatprep.subr.mxu0 0.0
      %1269 = vmatpush1.msra.mxu0 0.0
      %1270 = vmatprep.subr.mxu0 0.0
      %1271 = vmatpush1.msra.mxu0 0.0
      %1272 = vmatprep.subr.mxu0 0.0
      %1273 = vmatpush1.msra.mxu0 0.0
      %1274 = vmatprep.mubr.f32.mxu0 0.0
      %1275 = vmatmul.mubr.f32.gmra.mrb[0].mxu0 %v1019
      %v1276 = vpop.f32.mrb[0].mxu0
      %v1277 = vadd.f32 %v699, %v1276
      %v1278 = vpop.f32.mrb[0].mxu0
      %1279 = vmatprep.mubr.f32.mxu0 0.0
      %1280 = vmatmul.mubr.f32.gmra.mrb[0].mxu0 %v1022
      %v1281 = vpop.f32.mrb[0].mxu0
      %v1282 = vadd.f32 %v704, %v1281
      %v1283 = vpop.f32.mrb[0].mxu0
      %1284 = vmatprep.mubr.f32.mxu0 0.0
      %1285 = vmatmul.mubr.f32.gmra.mrb[0].mxu0 %v1025
      %v1286 = vpop.f32.mrb[0].mxu0
      %v1287 = vadd.f32 %v709, %v1286
      %v1288 = vpop.f32.mrb[0].mxu0
      %1289 = vmatprep.mubr.f32.mxu0 0.0
      %1290 = vmatmul.mubr.f32.gmra.mrb[0].mxu0 %v1028
      %v1291 = vpop.f32.mrb[0].mxu0
      %v1292 = vadd.f32 %v714, %v1291
      %v1293 = vpop.f32.mrb[0].mxu0
      %1294 = vmatprep.mubr.f32.mxu0 0.0
      %1295 = vmatmul.mubr.f32.gmra.mrb[0].mxu0 %v1031
      %v1296 = vpop.f32.mrb[0].mxu0
      %v1297 = vadd.f32 %v719, %v1296
      %v1298 = vpop.f32.mrb[0].mxu0
      %1299 = vmatprep.mubr.f32.mxu0 0.0
      %1300 = vmatmul.mubr.f32.gmra.mrb[0].mxu0 %v1034
      %v1301 = vpop.f32.mrb[0].mxu0
      %v1302 = vadd.f32 %v724, %v1301
      %v1303 = vpop.f32.mrb[0].mxu0
      %1304 = vmatprep.mubr.f32.mxu0 0.0
      %1305 = vmatmul.mubr.f32.gmra.mrb[0].mxu0 %v1037
      %v1306 = vpop.f32.mrb[0].mxu0
      %v1307 = vadd.f32 %v729, %v1306
      %v1308 = vpop.f32.mrb[0].mxu0
      %1309 = vmatprep.mubr.f32.mxu0 0.0
      %1310 = vmatmul.mubr.f32.gmra.mrb[0].mxu0 %v1040
      %v1311 = vpop.f32.mrb[0].mxu0
      %v1312 = vadd.f32 %v734, %v1311
      %v1313 = vpop.f32.mrb[0].mxu0
      %1314 = vmatprep.mubr.f32.mxu0 0.0
      %1315 = vmatmul.mubr.f32.gmra.mrb[0].mxu0 %v1043
      %v1316 = vpop.f32.mrb[0].mxu0
      %v1317 = vadd.f32 %v739, %v1316
      %v1318 = vpop.f32.mrb[0].mxu0
      %1319 = vmatprep.mubr.f32.mxu0 0.0
      %1320 = vmatmul.mubr.f32.gmra.mrb[0].mxu0 %v1046
      %v1321 = vpop.f32.mrb[0].mxu0
      %v1322 = vadd.f32 %v744, %v1321
      %v1323 = vpop.f32.mrb[0].mxu0
      %1324 = vmatprep.mubr.f32.mxu0 0.0
      %1325 = vmatmul.mubr.f32.gmra.mrb[0].mxu0 %v1049
      %v1326 = vpop.f32.mrb[0].mxu0
      %v1327 = vadd.f32 %v749, %v1326
      %v1328 = vpop.f32.mrb[0].mxu0
      %1329 = vmatprep.mubr.f32.mxu0 0.0
      %1330 = vmatmul.mubr.f32.gmra.mrb[0].mxu0 %v1052
      %v1331 = vpop.f32.mrb[0].mxu0
      %v1332 = vadd.f32 %v754, %v1331
      %v1333 = vpop.f32.mrb[0].mxu0
      %1334 = vmatprep.mubr.f32.mxu0 0.0
      %1335 = vmatmul.mubr.f32.gmra.mrb[0].mxu0 %v1055
      %v1336 = vpop.f32.mrb[0].mxu0
      %v1337 = vadd.f32 %v759, %v1336
      %v1338 = vpop.f32.mrb[0].mxu0
      %1339 = vmatprep.mubr.f32.mxu0 0.0
      %1340 = vmatmul.mubr.f32.gmra.mrb[0].mxu0 %v1058
      %v1341 = vpop.f32.mrb[0].mxu0
      %v1342 = vadd.f32 %v764, %v1341
      %v1343 = vpop.f32.mrb[0].mxu0
      %1344 = vmatprep.mubr.f32.mxu0 0.0
      %1345 = vmatmul.mubr.f32.gmra.mrb[0].mxu0 %v1061
      %v1346 = vpop.f32.mrb[0].mxu0
      %v1347 = vadd.f32 %v769, %v1346
      %v1348 = vpop.f32.mrb[0].mxu0
      %1349 = vmatprep.mubr.f32.mxu0 0.0
      %1350 = vmatmul.mubr.f32.gmra.mrb[0].mxu0 %v1064
      %v1351 = vpop.f32.mrb[0].mxu0
      %v1352 = vadd.f32 %v774, %v1351
      %v1353 = vpop.f32.mrb[0].mxu0
      %1354 = vmatprep.mubr.f32.mxu0 0.0
      %1355 = vmatmul.mubr.f32.gmra.mrb[0].mxu0 %v1067
      %v1356 = vpop.f32.mrb[0].mxu0
      %v1357 = vadd.f32 %v779, %v1356
      %v1358 = vpop.f32.mrb[0].mxu0
      %1359 = vmatprep.mubr.f32.mxu0 0.0
      %1360 = vmatmul.mubr.f32.gmra.mrb[0].mxu0 %v1070
      %v1361 = vpop.f32.mrb[0].mxu0
      %v1362 = vadd.f32 %v784, %v1361
      %v1363 = vpop.f32.mrb[0].mxu0
      %1364 = vmatprep.mubr.f32.mxu0 0.0
      %1365 = vmatmul.mubr.f32.gmra.mrb[0].mxu0 %v1073
      %v1366 = vpop.f32.mrb[0].mxu0
      %v1367 = vadd.f32 %v789, %v1366
      %v1368 = vpop.f32.mrb[0].mxu0
      %1369 = vmatprep.mubr.f32.mxu0 0.0
      %1370 = vmatmul.mubr.f32.gmra.mrb[0].mxu0 %v1076
      %v1371 = vpop.f32.mrb[0].mxu0
      %v1372 = vadd.f32 %v794, %v1371
      %v1373 = vpop.f32.mrb[0].mxu0
      %1374 = vmatprep.mubr.f32.mxu0 0.0
      %1375 = vmatmul.mubr.f32.gmra.mrb[0].mxu0 %v1079
      %v1376 = vpop.f32.mrb[0].mxu0
      %v1377 = vadd.f32 %v799, %v1376
      %v1378 = vpop.f32.mrb[0].mxu0
      %1379 = vmatprep.mubr.f32.mxu0 0.0
      %1380 = vmatmul.mubr.f32.gmra.mrb[0].mxu0 %v1082
      %v1381 = vpop.f32.mrb[0].mxu0
      %v1382 = vadd.f32 %v804, %v1381
      %v1383 = vpop.f32.mrb[0].mxu0
      %1384 = vmatprep.mubr.f32.mxu0 0.0
      %1385 = vmatmul.mubr.f32.gmra.mrb[0].mxu0 %v1085
      %v1386 = vpop.f32.mrb[0].mxu0
      %v1387 = vadd.f32 %v809, %v1386
      %v1388 = vpop.f32.mrb[0].mxu0
      %1389 = vmatprep.mubr.f32.mxu0 0.0
      %1390 = vmatmul.mubr.f32.gmra.mrb[0].mxu0 %v1088
      %v1391 = vpop.f32.mrb[0].mxu0
      %v1392 = vadd.f32 %v814, %v1391
      %v1393 = vpop.f32.mrb[0].mxu0
      %1394 = vmatprep.mubr.f32.mxu0 0.0
      %1395 = vmatmul.mubr.f32.gmra.mrb[0].mxu0 %v1091
      %v1396 = vpop.f32.mrb[0].mxu0
      %v1397 = vadd.f32 %v819, %v1396
      %v1398 = vpop.f32.mrb[0].mxu0
      %1399 = vmatprep.mubr.f32.mxu0 0.0
      %1400 = vmatmul.mubr.f32.gmra.mrb[0].mxu0 %v1094
      %v1401 = vpop.f32.mrb[0].mxu0
      %v1402 = vadd.f32 %v824, %v1401
      %v1403 = vpop.f32.mrb[0].mxu0
      %1404 = vmatprep.mubr.f32.mxu0 0.0
      %1405 = vmatmul.mubr.f32.gmra.mrb[0].mxu0 %v1097
      %v1406 = vpop.f32.mrb[0].mxu0
      %v1407 = vadd.f32 %v829, %v1406
      %v1408 = vpop.f32.mrb[0].mxu0
      %1409 = vmatprep.mubr.f32.mxu0 0.0
      %1410 = vmatmul.mubr.f32.gmra.mrb[0].mxu0 %v1100
      %v1411 = vpop.f32.mrb[0].mxu0
      %v1412 = vadd.f32 %v834, %v1411
      %v1413 = vpop.f32.mrb[0].mxu0
      %1414 = vmatprep.mubr.f32.mxu0 0.0
      %1415 = vmatmul.mubr.f32.gmra.mrb[0].mxu0 %v1103
      %v1416 = vpop.f32.mrb[0].mxu0
      %v1417 = vadd.f32 %v839, %v1416
      %v1418 = vpop.f32.mrb[0].mxu0
      %1419 = vmatprep.mubr.f32.mxu0 0.0
      %1420 = vmatmul.mubr.f32.gmra.mrb[0].mxu0 %v1106
      %v1421 = vpop.f32.mrb[0].mxu0
      %v1422 = vadd.f32 %v844, %v1421
      %v1423 = vpop.f32.mrb[0].mxu0
      %1424 = vmatprep.mubr.f32.mxu0 0.0
      %1425 = vmatmul.mubr.f32.gmra.mrb[0].mxu0 %v1109
      %v1426 = vpop.f32.mrb[0].mxu0
      %v1427 = vadd.f32 %v849, %v1426
      %v1428 = vpop.f32.mrb[0].mxu0
      %1429 = vmatprep.mubr.f32.mxu0 0.0
      %1430 = vmatmul.mubr.f32.gmra.mrb[0].mxu0 %v1112
      %v1431 = vpop.f32.mrb[0].mxu0
      %v1432 = vadd.f32 %v854, %v1431
      %v1433 = vpop.f32.mrb[0].mxu0
      %1434 = vmatprep.mubr.f32.mxu0 0.0
      %1435 = vmatmul.mubr.f32.gmra.mrb[0].mxu0 %v1115
      %v1436 = vpop.f32.mrb[0].mxu0
      %v1437 = vadd.f32 %v859, %v1436
      %v1438 = vpop.f32.mrb[0].mxu0
      %1439 = vmatprep.mubr.f32.mxu0 0.0
      %1440 = vmatmul.mubr.f32.gmra.mrb[0].mxu0 %v1118
      %v1441 = vpop.f32.mrb[0].mxu0
      %v1442 = vadd.f32 %v864, %v1441
      %v1443 = vpop.f32.mrb[0].mxu0
      %1444 = vmatprep.mubr.f32.mxu0 0.0
      %1445 = vmatmul.mubr.f32.gmra.mrb[0].mxu0 %v1121
      %v1446 = vpop.f32.mrb[0].mxu0
      %v1447 = vadd.f32 %v869, %v1446
      %v1448 = vpop.f32.mrb[0].mxu0
      %1449 = vmatprep.mubr.f32.mxu0 0.0
      %1450 = vmatmul.mubr.f32.gmra.mrb[0].mxu0 %v1124
      %v1451 = vpop.f32.mrb[0].mxu0
      %v1452 = vadd.f32 %v874, %v1451
      %v1453 = vpop.f32.mrb[0].mxu0
      %1454 = vmatprep.mubr.f32.mxu0 0.0
      %1455 = vmatmul.mubr.f32.gmra.mrb[0].mxu0 %v1127
      %v1456 = vpop.f32.mrb[0].mxu0
      %v1457 = vadd.f32 %v879, %v1456
      %v1458 = vpop.f32.mrb[0].mxu0
      %1459 = vmatprep.mubr.f32.mxu0 0.0
      %1460 = vmatmul.mubr.f32.gmra.mrb[0].mxu0 %v1130
      %v1461 = vpop.f32.mrb[0].mxu0
      %v1462 = vadd.f32 %v884, %v1461
      %v1463 = vpop.f32.mrb[0].mxu0
      %1464 = vmatprep.mubr.f32.mxu0 0.0
      %1465 = vmatmul.mubr.f32.gmra.mrb[0].mxu0 %v1133
      %v1466 = vpop.f32.mrb[0].mxu0
      %v1467 = vadd.f32 %v889, %v1466
      %v1468 = vpop.f32.mrb[0].mxu0
      %1469 = vmatprep.mubr.f32.mxu0 0.0
      %1470 = vmatmul.mubr.f32.gmra.mrb[0].mxu0 %v1136
      %v1471 = vpop.f32.mrb[0].mxu0
      %v1472 = vadd.f32 %v894, %v1471
      %v1473 = vpop.f32.mrb[0].mxu0
      %1474 = vmatprep.mubr.f32.mxu0 0.0
      %1475 = vmatmul.mubr.f32.gmra.mrb[0].mxu0 %v1139
      %v1476 = vpop.f32.mrb[0].mxu0
      %v1477 = vadd.f32 %v899, %v1476
      %v1478 = vpop.f32.mrb[0].mxu0
      %1479 = vmatprep.mubr.f32.mxu0 0.0
      %1480 = vmatmul.mubr.f32.gmra.mrb[0].mxu0 %v1142
      %v1481 = vpop.f32.mrb[0].mxu0
      %v1482 = vadd.f32 %v904, %v1481
      %v1483 = vpop.f32.mrb[0].mxu0
      %1484 = vmatprep.mubr.f32.mxu0 0.0
      %1485 = vmatmul.mubr.f32.gmra.mrb[0].mxu0 %v1145
      %v1486 = vpop.f32.mrb[0].mxu0
      %v1487 = vadd.f32 %v909, %v1486
      %v1488 = vpop.f32.mrb[0].mxu0
      %1489 = vmatprep.mubr.f32.mxu0 0.0
      %1490 = vmatmul.mubr.f32.gmra.mrb[0].mxu0 %v1148
      %v1491 = vpop.f32.mrb[0].mxu0
      %v1492 = vadd.f32 %v914, %v1491
      %v1493 = vpop.f32.mrb[0].mxu0
      %1494 = vmatprep.mubr.f32.mxu0 0.0
      %1495 = vmatmul.mubr.f32.gmra.mrb[0].mxu0 %v1151
      %v1496 = vpop.f32.mrb[0].mxu0
      %v1497 = vadd.f32 %v919, %v1496
      %v1498 = vpop.f32.mrb[0].mxu0
      %1499 = vmatprep.mubr.f32.mxu0 0.0
      %1500 = vmatmul.mubr.f32.gmra.mrb[0].mxu0 %v1154
      %v1501 = vpop.f32.mrb[0].mxu0
      %v1502 = vadd.f32 %v924, %v1501
      %v1503 = vpop.f32.mrb[0].mxu0
      %1504 = vmatprep.mubr.f32.mxu0 0.0
      %1505 = vmatmul.mubr.f32.gmra.mrb[0].mxu0 %v1157
      %v1506 = vpop.f32.mrb[0].mxu0
      %v1507 = vadd.f32 %v929, %v1506
      %v1508 = vpop.f32.mrb[0].mxu0
      %1509 = vmatprep.mubr.f32.mxu0 0.0
      %1510 = vmatmul.mubr.f32.gmra.mrb[0].mxu0 %v1160
      %v1511 = vpop.f32.mrb[0].mxu0
      %v1512 = vadd.f32 %v934, %v1511
      %v1513 = vpop.f32.mrb[0].mxu0
      %1514 = vmatprep.mubr.f32.mxu0 0.0
      %1515 = vmatmul.mubr.f32.gmra.mrb[0].mxu0 %v1163
      %v1516 = vpop.f32.mrb[0].mxu0
      %v1517 = vadd.f32 %v939, %v1516
      %v1518 = vpop.f32.mrb[0].mxu0
      %1519 = vmatprep.mubr.f32.mxu0 0.0
      %1520 = vmatmul.mubr.f32.gmra.mrb[0].mxu0 %v1166
      %v1521 = vpop.f32.mrb[0].mxu0
      %v1522 = vadd.f32 %v944, %v1521
      %v1523 = vpop.f32.mrb[0].mxu0
      %1524 = vmatprep.mubr.f32.mxu0 0.0
      %1525 = vmatmul.mubr.f32.gmra.mrb[0].mxu0 %v1169
      %v1526 = vpop.f32.mrb[0].mxu0
      %v1527 = vadd.f32 %v949, %v1526
      %v1528 = vpop.f32.mrb[0].mxu0
      %1529 = vmatprep.mubr.f32.mxu0 0.0
      %1530 = vmatmul.mubr.f32.gmra.mrb[0].mxu0 %v1172
      %v1531 = vpop.f32.mrb[0].mxu0
      %v1532 = vadd.f32 %v954, %v1531
      %v1533 = vpop.f32.mrb[0].mxu0
      %1534 = vmatprep.mubr.f32.mxu0 0.0
      %1535 = vmatmul.mubr.f32.gmra.mrb[0].mxu0 %v1175
      %v1536 = vpop.f32.mrb[0].mxu0
      %v1537 = vadd.f32 %v959, %v1536
      %v1538 = vpop.f32.mrb[0].mxu0
      %1539 = vmatprep.mubr.f32.mxu0 0.0
      %1540 = vmatmul.mubr.f32.gmra.mrb[0].mxu0 %v1178
      %v1541 = vpop.f32.mrb[0].mxu0
      %v1542 = vadd.f32 %v964, %v1541
      %v1543 = vpop.f32.mrb[0].mxu0
      %1544 = vmatprep.mubr.f32.mxu0 0.0
      %1545 = vmatmul.mubr.f32.gmra.mrb[0].mxu0 %v1181
      %v1546 = vpop.f32.mrb[0].mxu0
      %v1547 = vadd.f32 %v969, %v1546
      %v1548 = vpop.f32.mrb[0].mxu0
      %1549 = vmatprep.mubr.f32.mxu0 0.0
      %1550 = vmatmul.mubr.f32.gmra.mrb[0].mxu0 %v1184
      %v1551 = vpop.f32.mrb[0].mxu0
      %v1552 = vadd.f32 %v974, %v1551
      %v1553 = vpop.f32.mrb[0].mxu0
      %1554 = vmatprep.mubr.f32.mxu0 0.0
      %1555 = vmatmul.mubr.f32.gmra.mrb[0].mxu0 %v1187
      %v1556 = vpop.f32.mrb[0].mxu0
      %v1557 = vadd.f32 %v979, %v1556
      %v1558 = vpop.f32.mrb[0].mxu0
      %1559 = vmatprep.mubr.f32.mxu0 0.0
      %1560 = vmatmul.mubr.f32.gmra.mrb[0].mxu0 %v1190
      %v1561 = vpop.f32.mrb[0].mxu0
      %v1562 = vadd.f32 %v984, %v1561
      %v1563 = vpop.f32.mrb[0].mxu0
      %1564 = vmatprep.mubr.f32.mxu0 0.0
      %1565 = vmatmul.mubr.f32.gmra.mrb[0].mxu0 %v1193
      %v1566 = vpop.f32.mrb[0].mxu0
      %v1567 = vadd.f32 %v989, %v1566
      %v1568 = vpop.f32.mrb[0].mxu0
      %1569 = vmatprep.mubr.f32.mxu0 0.0
      %1570 = vmatmul.mubr.f32.gmra.mrb[0].mxu0 %v1196
      %v1571 = vpop.f32.mrb[0].mxu0
      %v1572 = vadd.f32 %v994, %v1571
      %v1573 = vpop.f32.mrb[0].mxu0
      %1574 = vmatprep.mubr.f32.mxu0 0.0
      %1575 = vmatmul.mubr.f32.gmra.mrb[0].mxu0 %v1199
      %v1576 = vpop.f32.mrb[0].mxu0
      %v1577 = vadd.f32 %v999, %v1576
      %v1578 = vpop.f32.mrb[0].mxu0
      %1579 = vmatprep.mubr.f32.mxu0 0.0
      %1580 = vmatmul.mubr.f32.gmra.mrb[0].mxu0 %v1202
      %v1581 = vpop.f32.mrb[0].mxu0
      %v1582 = vadd.f32 %v1004, %v1581
      %v1583 = vpop.f32.mrb[0].mxu0
      %1584 = vmatprep.mubr.f32.mxu0 0.0
      %1585 = vmatmul.mubr.f32.gmra.mrb[0].mxu0 %v1205
      %v1586 = vpop.f32.mrb[0].mxu0
      %v1587 = vadd.f32 %v1009, %v1586
      %v1588 = vpop.f32.mrb[0].mxu0
      %1589 = vmatprep.mubr.f32.mxu0 0.0
      %1590 = vmatmul.mubr.f32.gmra.mrb[0].mxu0 %v1208
      %v1591 = vpop.f32.mrb[0].mxu0
      %v1592 = vadd.f32 %v1014, %v1591
      %v1593 = vpop.f32.mrb[0].mxu0
      %1594 = vdwg.mxu0
      %v1595 = vld [vmem:[%s4] sm:$0x1]
      %v1597 = vlaneseq
      %v1598 = vshrl.u32 %v1597, 7
      %v1599 = vsub.s32 0, %v1598
      %v1600 = vrot.slane %v1595, %v1599
      %v1602 = vadd.f32 %v1277, %v1600
      %v1603 = vadd.f32 %v1282, %v1600
      %v1604 = vadd.f32 %v1287, %v1600
      %v1605 = vadd.f32 %v1292, %v1600
      %v1606 = vadd.f32 %v1297, %v1600
      %v1607 = vadd.f32 %v1302, %v1600
      %v1608 = vadd.f32 %v1307, %v1600
      %v1609 = vadd.f32 %v1312, %v1600
      %v1610 = vadd.f32 %v1317, %v1600
      %v1611 = vadd.f32 %v1322, %v1600
      %v1612 = vadd.f32 %v1327, %v1600
      %v1613 = vadd.f32 %v1332, %v1600
      %v1614 = vadd.f32 %v1337, %v1600
      %v1615 = vadd.f32 %v1342, %v1600
      %v1616 = vadd.f32 %v1347, %v1600
      %v1617 = vadd.f32 %v1352, %v1600
      %v1618 = vadd.f32 %v1357, %v1600
      %v1619 = vadd.f32 %v1362, %v1600
      %v1620 = vadd.f32 %v1367, %v1600
      %v1621 = vadd.f32 %v1372, %v1600
      %v1622 = vadd.f32 %v1377, %v1600
      %v1623 = vadd.f32 %v1382, %v1600
      %v1624 = vadd.f32 %v1387, %v1600
      %v1625 = vadd.f32 %v1392, %v1600
      %v1626 = vadd.f32 %v1397, %v1600
      %v1627 = vadd.f32 %v1402, %v1600
      %v1628 = vadd.f32 %v1407, %v1600
      %v1629 = vadd.f32 %v1412, %v1600
      %v1630 = vadd.f32 %v1417, %v1600
      %v1631 = vadd.f32 %v1422, %v1600
      %v1632 = vadd.f32 %v1427, %v1600
      %v1633 = vadd.f32 %v1432, %v1600
      %v1634 = vadd.f32 %v1437, %v1600
      %v1635 = vadd.f32 %v1442, %v1600
      %v1636 = vadd.f32 %v1447, %v1600
      %v1637 = vadd.f32 %v1452, %v1600
      %v1638 = vadd.f32 %v1457, %v1600
      %v1639 = vadd.f32 %v1462, %v1600
      %v1640 = vadd.f32 %v1467, %v1600
      %v1641 = vadd.f32 %v1472, %v1600
      %v1642 = vadd.f32 %v1477, %v1600
      %v1643 = vadd.f32 %v1482, %v1600
      %v1644 = vadd.f32 %v1487, %v1600
      %v1645 = vadd.f32 %v1492, %v1600
      %v1646 = vadd.f32 %v1497, %v1600
      %v1647 = vadd.f32 %v1502, %v1600
      %v1648 = vadd.f32 %v1507, %v1600
      %v1649 = vadd.f32 %v1512, %v1600
      %v1650 = vadd.f32 %v1517, %v1600
      %v1651 = vadd.f32 %v1522, %v1600
      %v1652 = vadd.f32 %v1527, %v1600
      %v1653 = vadd.f32 %v1532, %v1600
      %v1654 = vadd.f32 %v1537, %v1600
      %v1655 = vadd.f32 %v1542, %v1600
      %v1656 = vadd.f32 %v1547, %v1600
      %v1657 = vadd.f32 %v1552, %v1600
      %v1658 = vadd.f32 %v1557, %v1600
      %v1659 = vadd.f32 %v1562, %v1600
      %v1660 = vadd.f32 %v1567, %v1600
      %v1661 = vadd.f32 %v1572, %v1600
      %v1662 = vadd.f32 %v1577, %v1600
      %v1663 = vadd.f32 %v1582, %v1600
      %v1664 = vadd.f32 %v1587, %v1600
      %v1665 = vadd.f32 %v1592, %v1600
      %vm1666 = vcmp.ge.f32.partialorder %v1602, 0.0
      %vm1667 = vcmp.ge.f32.partialorder %v1603, 0.0
      %vm1668 = vcmp.ge.f32.partialorder %v1604, 0.0
      %vm1669 = vcmp.ge.f32.partialorder %v1605, 0.0
      %vm1670 = vcmp.ge.f32.partialorder %v1606, 0.0
      %vm1671 = vcmp.ge.f32.partialorder %v1607, 0.0
      %vm1672 = vcmp.ge.f32.partialorder %v1608, 0.0
      %vm1673 = vcmp.ge.f32.partialorder %v1609, 0.0
      %vm1674 = vcmp.ge.f32.partialorder %v1610, 0.0
      %vm1675 = vcmp.ge.f32.partialorder %v1611, 0.0
      %vm1676 = vcmp.ge.f32.partialorder %v1612, 0.0
      %vm1677 = vcmp.ge.f32.partialorder %v1613, 0.0
      %vm1678 = vcmp.ge.f32.partialorder %v1614, 0.0
      %vm1679 = vcmp.ge.f32.partialorder %v1615, 0.0
      %vm1680 = vcmp.ge.f32.partialorder %v1616, 0.0
      %vm1681 = vcmp.ge.f32.partialorder %v1617, 0.0
      %vm1682 = vcmp.ge.f32.partialorder %v1618, 0.0
      %vm1683 = vcmp.ge.f32.partialorder %v1619, 0.0
      %vm1684 = vcmp.ge.f32.partialorder %v1620, 0.0
      %vm1685 = vcmp.ge.f32.partialorder %v1621, 0.0
      %vm1686 = vcmp.ge.f32.partialorder %v1622, 0.0
      %vm1687 = vcmp.ge.f32.partialorder %v1623, 0.0
      %vm1688 = vcmp.ge.f32.partialorder %v1624, 0.0
      %vm1689 = vcmp.ge.f32.partialorder %v1625, 0.0
      %vm1690 = vcmp.ge.f32.partialorder %v1626, 0.0
      %vm1691 = vcmp.ge.f32.partialorder %v1627, 0.0
      %vm1692 = vcmp.ge.f32.partialorder %v1628, 0.0
      %vm1693 = vcmp.ge.f32.partialorder %v1629, 0.0
      %vm1694 = vcmp.ge.f32.partialorder %v1630, 0.0
      %vm1695 = vcmp.ge.f32.partialorder %v1631, 0.0
      %vm1696 = vcmp.ge.f32.partialorder %v1632, 0.0
      %vm1697 = vcmp.ge.f32.partialorder %v1633, 0.0
      %vm1698 = vcmp.ge.f32.partialorder %v1634, 0.0
      %vm1699 = vcmp.ge.f32.partialorder %v1635, 0.0
      %vm1700 = vcmp.ge.f32.partialorder %v1636, 0.0
      %vm1701 = vcmp.ge.f32.partialorder %v1637, 0.0
      %vm1702 = vcmp.ge.f32.partialorder %v1638, 0.0
      %vm1703 = vcmp.ge.f32.partialorder %v1639, 0.0
      %vm1704 = vcmp.ge.f32.partialorder %v1640, 0.0
      %vm1705 = vcmp.ge.f32.partialorder %v1641, 0.0
      %vm1706 = vcmp.ge.f32.partialorder %v1642, 0.0
      %vm1707 = vcmp.ge.f32.partialorder %v1643, 0.0
      %vm1708 = vcmp.ge.f32.partialorder %v1644, 0.0
      %vm1709 = vcmp.ge.f32.partialorder %v1645, 0.0
      %vm1710 = vcmp.ge.f32.partialorder %v1646, 0.0
      %vm1711 = vcmp.ge.f32.partialorder %v1647, 0.0
      %vm1712 = vcmp.ge.f32.partialorder %v1648, 0.0
      %vm1713 = vcmp.ge.f32.partialorder %v1649, 0.0
      %vm1714 = vcmp.ge.f32.partialorder %v1650, 0.0
      %vm1715 = vcmp.ge.f32.partialorder %v1651, 0.0
      %vm1716 = vcmp.ge.f32.partialorder %v1652, 0.0
      %vm1717 = vcmp.ge.f32.partialorder %v1653, 0.0
      %vm1718 = vcmp.ge.f32.partialorder %v1654, 0.0
      %vm1719 = vcmp.ge.f32.partialorder %v1655, 0.0
      %vm1720 = vcmp.ge.f32.partialorder %v1656, 0.0
      %vm1721 = vcmp.ge.f32.partialorder %v1657, 0.0
      %vm1722 = vcmp.ge.f32.partialorder %v1658, 0.0
      %vm1723 = vcmp.ge.f32.partialorder %v1659, 0.0
      %vm1724 = vcmp.ge.f32.partialorder %v1660, 0.0
      %vm1725 = vcmp.ge.f32.partialorder %v1661, 0.0
      %vm1726 = vcmp.ge.f32.partialorder %v1662, 0.0
      %vm1727 = vcmp.ge.f32.partialorder %v1663, 0.0
      %vm1728 = vcmp.ge.f32.partialorder %v1664, 0.0
      %vm1729 = vcmp.ge.f32.partialorder %v1665, 0.0
      %v1730 = vmul.f32 %v1602, 0.02
      %v1731 = vmul.f32 %v1603, 0.02
      %v1732 = vmul.f32 %v1604, 0.02
      %v1733 = vmul.f32 %v1605, 0.02
      %v1734 = vmul.f32 %v1606, 0.02
      %v1735 = vmul.f32 %v1607, 0.02
      %v1736 = vmul.f32 %v1608, 0.02
      %v1737 = vmul.f32 %v1609, 0.02
      %v1738 = vmul.f32 %v1610, 0.02
      %v1739 = vmul.f32 %v1611, 0.02
      %v1740 = vmul.f32 %v1612, 0.02
      %v1741 = vmul.f32 %v1613, 0.02
      %v1742 = vmul.f32 %v1614, 0.02
      %v1743 = vmul.f32 %v1615, 0.02
      %v1744 = vmul.f32 %v1616, 0.02
      %v1745 = vmul.f32 %v1617, 0.02
      %v1746 = vmul.f32 %v1618, 0.02
      %v1747 = vmul.f32 %v1619, 0.02
      %v1748 = vmul.f32 %v1620, 0.02
      %v1749 = vmul.f32 %v1621, 0.02
      %v1750 = vmul.f32 %v1622, 0.02
      %v1751 = vmul.f32 %v1623, 0.02
      %v1752 = vmul.f32 %v1624, 0.02
      %v1753 = vmul.f32 %v1625, 0.02
      %v1754 = vmul.f32 %v1626, 0.02
      %v1755 = vmul.f32 %v1627, 0.02
      %v1756 = vmul.f32 %v1628, 0.02
      %v1757 = vmul.f32 %v1629, 0.02
      %v1758 = vmul.f32 %v1630, 0.02
      %v1759 = vmul.f32 %v1631, 0.02
      %v1760 = vmul.f32 %v1632, 0.02
      %v1761 = vmul.f32 %v1633, 0.02
      %v1762 = vmul.f32 %v1634, 0.02
      %v1763 = vmul.f32 %v1635, 0.02
      %v1764 = vmul.f32 %v1636, 0.02
      %v1765 = vmul.f32 %v1637, 0.02
      %v1766 = vmul.f32 %v1638, 0.02
      %v1767 = vmul.f32 %v1639, 0.02
      %v1768 = vmul.f32 %v1640, 0.02
      %v1769 = vmul.f32 %v1641, 0.02
      %v1770 = vmul.f32 %v1642, 0.02
      %v1771 = vmul.f32 %v1643, 0.02
      %v1772 = vmul.f32 %v1644, 0.02
      %v1773 = vmul.f32 %v1645, 0.02
      %v1774 = vmul.f32 %v1646, 0.02
      %v1775 = vmul.f32 %v1647, 0.02
      %v1776 = vmul.f32 %v1648, 0.02
      %v1777 = vmul.f32 %v1649, 0.02
      %v1778 = vmul.f32 %v1650, 0.02
      %v1779 = vmul.f32 %v1651, 0.02
      %v1780 = vmul.f32 %v1652, 0.02
      %v1781 = vmul.f32 %v1653, 0.02
      %v1782 = vmul.f32 %v1654, 0.02
      %v1783 = vmul.f32 %v1655, 0.02
      %v1784 = vmul.f32 %v1656, 0.02
      %v1785 = vmul.f32 %v1657, 0.02
      %v1786 = vmul.f32 %v1658, 0.02
      %v1787 = vmul.f32 %v1659, 0.02
      %v1788 = vmul.f32 %v1660, 0.02
      %v1789 = vmul.f32 %v1661, 0.02
      %v1790 = vmul.f32 %v1662, 0.02
      %v1791 = vmul.f32 %v1663, 0.02
      %v1792 = vmul.f32 %v1664, 0.02
      %v1793 = vmul.f32 %v1665, 0.02
      %v1794 = vsel %vm1666, %v1602, %v1730
      %v1795 = vsel %vm1667, %v1603, %v1731
      %v1796 = vsel %vm1668, %v1604, %v1732
      %v1797 = vsel %vm1669, %v1605, %v1733
      %v1798 = vsel %vm1670, %v1606, %v1734
      %v1799 = vsel %vm1671, %v1607, %v1735
      %v1800 = vsel %vm1672, %v1608, %v1736
      %v1801 = vsel %vm1673, %v1609, %v1737
      %v1802 = vsel %vm1674, %v1610, %v1738
      %v1803 = vsel %vm1675, %v1611, %v1739
      %v1804 = vsel %vm1676, %v1612, %v1740
      %v1805 = vsel %vm1677, %v1613, %v1741
      %v1806 = vsel %vm1678, %v1614, %v1742
      %v1807 = vsel %vm1679, %v1615, %v1743
      %v1808 = vsel %vm1680, %v1616, %v1744
      %v1809 = vsel %vm1681, %v1617, %v1745
      %v1810 = vsel %vm1682, %v1618, %v1746
      %v1811 = vsel %vm1683, %v1619, %v1747
      %v1812 = vsel %vm1684, %v1620, %v1748
      %v1813 = vsel %vm1685, %v1621, %v1749
      %v1814 = vsel %vm1686, %v1622, %v1750
      %v1815 = vsel %vm1687, %v1623, %v1751
      %v1816 = vsel %vm1688, %v1624, %v1752
      %v1817 = vsel %vm1689, %v1625, %v1753
      %v1818 = vsel %vm1690, %v1626, %v1754
      %v1819 = vsel %vm1691, %v1627, %v1755
      %v1820 = vsel %vm1692, %v1628, %v1756
      %v1821 = vsel %vm1693, %v1629, %v1757
      %v1822 = vsel %vm1694, %v1630, %v1758
      %v1823 = vsel %vm1695, %v1631, %v1759
      %v1824 = vsel %vm1696, %v1632, %v1760
      %v1825 = vsel %vm1697, %v1633, %v1761
      %v1826 = vsel %vm1698, %v1634, %v1762
      %v1827 = vsel %vm1699, %v1635, %v1763
      %v1828 = vsel %vm1700, %v1636, %v1764
      %v1829 = vsel %vm1701, %v1637, %v1765
      %v1830 = vsel %vm1702, %v1638, %v1766
      %v1831 = vsel %vm1703, %v1639, %v1767
      %v1832 = vsel %vm1704, %v1640, %v1768
      %v1833 = vsel %vm1705, %v1641, %v1769
      %v1834 = vsel %vm1706, %v1642, %v1770
      %v1835 = vsel %vm1707, %v1643, %v1771
      %v1836 = vsel %vm1708, %v1644, %v1772
      %v1837 = vsel %vm1709, %v1645, %v1773
      %v1838 = vsel %vm1710, %v1646, %v1774
      %v1839 = vsel %vm1711, %v1647, %v1775
      %v1840 = vsel %vm1712, %v1648, %v1776
      %v1841 = vsel %vm1713, %v1649, %v1777
      %v1842 = vsel %vm1714, %v1650, %v1778
      %v1843 = vsel %vm1715, %v1651, %v1779
      %v1844 = vsel %vm1716, %v1652, %v1780
      %v1845 = vsel %vm1717, %v1653, %v1781
      %v1846 = vsel %vm1718, %v1654, %v1782
      %v1847 = vsel %vm1719, %v1655, %v1783
      %v1848 = vsel %vm1720, %v1656, %v1784
      %v1849 = vsel %vm1721, %v1657, %v1785
      %v1850 = vsel %vm1722, %v1658, %v1786
      %v1851 = vsel %vm1723, %v1659, %v1787
      %v1852 = vsel %vm1724, %v1660, %v1788
      %v1853 = vsel %vm1725, %v1661, %v1789
      %v1854 = vsel %vm1726, %v1662, %v1790
      %v1855 = vsel %vm1727, %v1663, %v1791
      %v1856 = vsel %vm1728, %v1664, %v1792
      %v1857 = vsel %vm1729, %v1665, %v1793
      %v1858 = vld [vmem:[%s5] sm:$0xff]
      %v1859 = vld [vmem:[%s5 + $0x8] sm:$0xff]
      %v1860 = vld [vmem:[%s5 + $0x10] sm:$0xff]
      %v1861 = vld [vmem:[%s5 + $0x18] sm:$0xff]
      %v1862 = vld [vmem:[%s6] sm:$0x1]
      %v1864 = vlaneseq
      %v1865 = vshrl.u32 %v1864, 7
      %v1866 = vsub.s32 0, %v1865
      %v1867 = vrot.slane %v1862, %v1866
      %vm1869 = vcmask 261120
      %v1871 = vsel %vm1869, %v1794, 0
      %v1874 = vsel %vm1869, %v1795, 0
      %v1877 = vsel %vm1869, %v1796, 0
      %v1880 = vsel %vm1869, %v1797, 0
      %v1883 = vsel %vm1869, %v1798, 0
      %v1886 = vsel %vm1869, %v1799, 0
      %v1889 = vsel %vm1869, %v1800, 0
      %v1892 = vsel %vm1869, %v1801, 0
      %v1895 = vsel %vm1869, %v1802, 0
      %v1898 = vsel %vm1869, %v1803, 0
      %v1901 = vsel %vm1869, %v1804, 0
      %v1904 = vsel %vm1869, %v1805, 0
      %v1907 = vsel %vm1869, %v1806, 0
      %v1910 = vsel %vm1869, %v1807, 0
      %v1913 = vsel %vm1869, %v1808, 0
      %v1916 = vsel %vm1869, %v1809, 0
      %v1919 = vsel %vm1869, %v1810, 0
      %v1922 = vsel %vm1869, %v1811, 0
      %v1925 = vsel %vm1869, %v1812, 0
      %v1928 = vsel %vm1869, %v1813, 0
      %v1931 = vsel %vm1869, %v1814, 0
      %v1934 = vsel %vm1869, %v1815, 0
      %v1937 = vsel %vm1869, %v1816, 0
      %v1940 = vsel %vm1869, %v1817, 0
      %v1943 = vsel %vm1869, %v1818, 0
      %v1946 = vsel %vm1869, %v1819, 0
      %v1949 = vsel %vm1869, %v1820, 0
      %v1952 = vsel %vm1869, %v1821, 0
      %v1955 = vsel %vm1869, %v1822, 0
      %v1958 = vsel %vm1869, %v1823, 0
      %v1961 = vsel %vm1869, %v1824, 0
      %v1964 = vsel %vm1869, %v1825, 0
      %v1967 = vsel %vm1869, %v1826, 0
      %v1970 = vsel %vm1869, %v1827, 0
      %v1973 = vsel %vm1869, %v1828, 0
      %v1976 = vsel %vm1869, %v1829, 0
      %v1979 = vsel %vm1869, %v1830, 0
      %v1982 = vsel %vm1869, %v1831, 0
      %v1985 = vsel %vm1869, %v1832, 0
      %v1988 = vsel %vm1869, %v1833, 0
      %v1991 = vsel %vm1869, %v1834, 0
      %v1994 = vsel %vm1869, %v1835, 0
      %v1997 = vsel %vm1869, %v1836, 0
      %v2000 = vsel %vm1869, %v1837, 0
      %v2003 = vsel %vm1869, %v1838, 0
      %v2006 = vsel %vm1869, %v1839, 0
      %v2009 = vsel %vm1869, %v1840, 0
      %v2012 = vsel %vm1869, %v1841, 0
      %v2015 = vsel %vm1869, %v1842, 0
      %v2018 = vsel %vm1869, %v1843, 0
      %v2021 = vsel %vm1869, %v1844, 0
      %v2024 = vsel %vm1869, %v1845, 0
      %v2027 = vsel %vm1869, %v1846, 0
      %v2030 = vsel %vm1869, %v1847, 0
      %v2033 = vsel %vm1869, %v1848, 0
      %v2036 = vsel %vm1869, %v1849, 0
      %v2039 = vsel %vm1869, %v1850, 0
      %v2042 = vsel %vm1869, %v1851, 0
      %v2045 = vsel %vm1869, %v1852, 0
      %v2048 = vsel %vm1869, %v1853, 0
      %v2051 = vsel %vm1869, %v1854, 0
      %v2054 = vsel %vm1869, %v1855, 0
      %v2057 = vsel %vm1869, %v1856, 0
      %v2060 = vsel %vm1869, %v1857, 0
      %2062 = vmatprep.subr.mxu0 0.0
      %2063 = vmatpush1.msra.mxu0 %v1858
      %2064 = vmatprep.subr.mxu0 0.0
      %2065 = vmatpush1.msra.mxu0 %v1859
      %2066 = vmatprep.subr.mxu0 0.0
      %2067 = vmatpush1.msra.mxu0 %v1860
      %2068 = vmatprep.subr.mxu0 0.0
      %2069 = vmatpush1.msra.mxu0 %v1861
      %2070 = vmatprep.subr.mxu0 0.0
      %2071 = vmatpush1.msra.mxu0 0.0
      %2072 = vmatprep.subr.mxu0 0.0
      %2073 = vmatpush1.msra.mxu0 0.0
      %2074 = vmatprep.subr.mxu0 0.0
      %2075 = vmatpush1.msra.mxu0 0.0
      %2076 = vmatprep.subr.mxu0 0.0
      %2077 = vmatpush1.msra.mxu0 0.0
      %2078 = vmatprep.subr.mxu0 0.0
      %2079 = vmatpush1.msra.mxu0 0.0
      %2080 = vmatprep.subr.mxu0 0.0
      %2081 = vmatpush1.msra.mxu0 0.0
      %2082 = vmatprep.subr.mxu0 0.0
      %2083 = vmatpush1.msra.mxu0 0.0
      %2084 = vmatprep.subr.mxu0 0.0
      %2085 = vmatpush1.msra.mxu0 0.0
      %2086 = vmatprep.subr.mxu0 0.0
      %2087 = vmatpush1.msra.mxu0 0.0
      %2088 = vmatprep.subr.mxu0 0.0
      %2089 = vmatpush1.msra.mxu0 0.0
      %2090 = vmatprep.subr.mxu0 0.0
      %2091 = vmatpush1.msra.mxu0 0.0
      %2092 = vmatprep.subr.mxu0 0.0
      %2093 = vmatpush1.msra.mxu0 0.0
      %2094 = vmatprep.subr.mxu0 0.0
      %2095 = vmatpush1.msra.mxu0 0.0
      %2096 = vmatprep.subr.mxu0 0.0
      %2097 = vmatpush1.msra.mxu0 0.0
      %2098 = vmatprep.subr.mxu0 0.0
      %2099 = vmatpush1.msra.mxu0 0.0
      %2100 = vmatprep.subr.mxu0 0.0
      %2101 = vmatpush1.msra.mxu0 0.0
      %2102 = vmatprep.subr.mxu0 0.0
      %2103 = vmatpush1.msra.mxu0 0.0
      %2104 = vmatprep.subr.mxu0 0.0
      %2105 = vmatpush1.msra.mxu0 0.0
      %2106 = vmatprep.subr.mxu0 0.0
      %2107 = vmatpush1.msra.mxu0 0.0
      %2108 = vmatprep.subr.mxu0 0.0
      %2109 = vmatpush1.msra.mxu0 0.0
      %2110 = vmatprep.subr.mxu0 0.0
      %2111 = vmatpush1.msra.mxu0 0.0
      %2112 = vmatprep.subr.mxu0 0.0
      %2113 = vmatpush1.msra.mxu0 0.0
      %2114 = vmatprep.subr.mxu0 0.0
      %2115 = vmatpush1.msra.mxu0 0.0
      %2116 = vmatprep.subr.mxu0 0.0
      %2117 = vmatpush1.msra.mxu0 0.0
      %2118 = vmatprep.subr.mxu0 0.0
      %2119 = vmatpush1.msra.mxu0 0.0
      %2120 = vmatprep.subr.mxu0 0.0
      %2121 = vmatpush1.msra.mxu0 0.0
      %2122 = vmatprep.subr.mxu0 0.0
      %2123 = vmatpush1.msra.mxu0 0.0
      %2124 = vmatprep.subr.mxu0 0.0
      %2125 = vmatpush1.msra.mxu0 0.0
      %2126 = vmatprep.mubr.f32.mxu0 0.0
      %2127 = vmatmul.mubr.f32.gmra.mrb[0].mxu0 %v1871
      %v2128 = vpop.f32.mrb[0].mxu0
      %v2129 = vadd.f32 %v1867, %v2128
      %v2130 = vpop.f32.mrb[0].mxu0
      %2131 = vmatprep.mubr.f32.mxu0 0.0
      %2132 = vmatmul.mubr.f32.gmra.mrb[0].mxu0 %v1874
      %v2133 = vpop.f32.mrb[0].mxu0
      %v2134 = vadd.f32 %v1867, %v2133
      %v2135 = vpop.f32.mrb[0].mxu0
      %2136 = vmatprep.mubr.f32.mxu0 0.0
      %2137 = vmatmul.mubr.f32.gmra.mrb[0].mxu0 %v1877
      %v2138 = vpop.f32.mrb[0].mxu0
      %v2139 = vadd.f32 %v1867, %v2138
      %v2140 = vpop.f32.mrb[0].mxu0
      %2141 = vmatprep.mubr.f32.mxu0 0.0
      %2142 = vmatmul.mubr.f32.gmra.mrb[0].mxu0 %v1880
      %v2143 = vpop.f32.mrb[0].mxu0
      %v2144 = vadd.f32 %v1867, %v2143
      %v2145 = vpop.f32.mrb[0].mxu0
      %2146 = vmatprep.mubr.f32.mxu0 0.0
      %2147 = vmatmul.mubr.f32.gmra.mrb[0].mxu0 %v1883
      %v2148 = vpop.f32.mrb[0].mxu0
      %v2149 = vadd.f32 %v1867, %v2148
      %v2150 = vpop.f32.mrb[0].mxu0
      %2151 = vmatprep.mubr.f32.mxu0 0.0
      %2152 = vmatmul.mubr.f32.gmra.mrb[0].mxu0 %v1886
      %v2153 = vpop.f32.mrb[0].mxu0
      %v2154 = vadd.f32 %v1867, %v2153
      %v2155 = vpop.f32.mrb[0].mxu0
      %2156 = vmatprep.mubr.f32.mxu0 0.0
      %2157 = vmatmul.mubr.f32.gmra.mrb[0].mxu0 %v1889
      %v2158 = vpop.f32.mrb[0].mxu0
      %v2159 = vadd.f32 %v1867, %v2158
      %v2160 = vpop.f32.mrb[0].mxu0
      %2161 = vmatprep.mubr.f32.mxu0 0.0
      %2162 = vmatmul.mubr.f32.gmra.mrb[0].mxu0 %v1892
      %v2163 = vpop.f32.mrb[0].mxu0
      %v2164 = vadd.f32 %v1867, %v2163
      %v2165 = vpop.f32.mrb[0].mxu0
      %2166 = vmatprep.mubr.f32.mxu0 0.0
      %2167 = vmatmul.mubr.f32.gmra.mrb[0].mxu0 %v1895
      %v2168 = vpop.f32.mrb[0].mxu0
      %v2169 = vadd.f32 %v1867, %v2168
      %v2170 = vpop.f32.mrb[0].mxu0
      %2171 = vmatprep.mubr.f32.mxu0 0.0
      %2172 = vmatmul.mubr.f32.gmra.mrb[0].mxu0 %v1898
      %v2173 = vpop.f32.mrb[0].mxu0
      %v2174 = vadd.f32 %v1867, %v2173
      %v2175 = vpop.f32.mrb[0].mxu0
      %2176 = vmatprep.mubr.f32.mxu0 0.0
      %2177 = vmatmul.mubr.f32.gmra.mrb[0].mxu0 %v1901
      %v2178 = vpop.f32.mrb[0].mxu0
      %v2179 = vadd.f32 %v1867, %v2178
      %v2180 = vpop.f32.mrb[0].mxu0
      %2181 = vmatprep.mubr.f32.mxu0 0.0
      %2182 = vmatmul.mubr.f32.gmra.mrb[0].mxu0 %v1904
      %v2183 = vpop.f32.mrb[0].mxu0
      %v2184 = vadd.f32 %v1867, %v2183
      %v2185 = vpop.f32.mrb[0].mxu0
      %2186 = vmatprep.mubr.f32.mxu0 0.0
      %2187 = vmatmul.mubr.f32.gmra.mrb[0].mxu0 %v1907
      %v2188 = vpop.f32.mrb[0].mxu0
      %v2189 = vadd.f32 %v1867, %v2188
      %v2190 = vpop.f32.mrb[0].mxu0
      %2191 = vmatprep.mubr.f32.mxu0 0.0
      %2192 = vmatmul.mubr.f32.gmra.mrb[0].mxu0 %v1910
      %v2193 = vpop.f32.mrb[0].mxu0
      %v2194 = vadd.f32 %v1867, %v2193
      %v2195 = vpop.f32.mrb[0].mxu0
      %2196 = vmatprep.mubr.f32.mxu0 0.0
      %2197 = vmatmul.mubr.f32.gmra.mrb[0].mxu0 %v1913
      %v2198 = vpop.f32.mrb[0].mxu0
      %v2199 = vadd.f32 %v1867, %v2198
      %v2200 = vpop.f32.mrb[0].mxu0
      %2201 = vmatprep.mubr.f32.mxu0 0.0
      %2202 = vmatmul.mubr.f32.gmra.mrb[0].mxu0 %v1916
      %v2203 = vpop.f32.mrb[0].mxu0
      %v2204 = vadd.f32 %v1867, %v2203
      %v2205 = vpop.f32.mrb[0].mxu0
      %2206 = vmatprep.mubr.f32.mxu0 0.0
      %2207 = vmatmul.mubr.f32.gmra.mrb[0].mxu0 %v1919
      %v2208 = vpop.f32.mrb[0].mxu0
      %v2209 = vadd.f32 %v1867, %v2208
      %v2210 = vpop.f32.mrb[0].mxu0
      %2211 = vmatprep.mubr.f32.mxu0 0.0
      %2212 = vmatmul.mubr.f32.gmra.mrb[0].mxu0 %v1922
      %v2213 = vpop.f32.mrb[0].mxu0
      %v2214 = vadd.f32 %v1867, %v2213
      %v2215 = vpop.f32.mrb[0].mxu0
      %2216 = vmatprep.mubr.f32.mxu0 0.0
      %2217 = vmatmul.mubr.f32.gmra.mrb[0].mxu0 %v1925
      %v2218 = vpop.f32.mrb[0].mxu0
      %v2219 = vadd.f32 %v1867, %v2218
      %v2220 = vpop.f32.mrb[0].mxu0
      %2221 = vmatprep.mubr.f32.mxu0 0.0
      %2222 = vmatmul.mubr.f32.gmra.mrb[0].mxu0 %v1928
      %v2223 = vpop.f32.mrb[0].mxu0
      %v2224 = vadd.f32 %v1867, %v2223
      %v2225 = vpop.f32.mrb[0].mxu0
      %2226 = vmatprep.mubr.f32.mxu0 0.0
      %2227 = vmatmul.mubr.f32.gmra.mrb[0].mxu0 %v1931
      %v2228 = vpop.f32.mrb[0].mxu0
      %v2229 = vadd.f32 %v1867, %v2228
      %v2230 = vpop.f32.mrb[0].mxu0
      %2231 = vmatprep.mubr.f32.mxu0 0.0
      %2232 = vmatmul.mubr.f32.gmra.mrb[0].mxu0 %v1934
      %v2233 = vpop.f32.mrb[0].mxu0
      %v2234 = vadd.f32 %v1867, %v2233
      %v2235 = vpop.f32.mrb[0].mxu0
      %2236 = vmatprep.mubr.f32.mxu0 0.0
      %2237 = vmatmul.mubr.f32.gmra.mrb[0].mxu0 %v1937
      %v2238 = vpop.f32.mrb[0].mxu0
      %v2239 = vadd.f32 %v1867, %v2238
      %v2240 = vpop.f32.mrb[0].mxu0
      %2241 = vmatprep.mubr.f32.mxu0 0.0
      %2242 = vmatmul.mubr.f32.gmra.mrb[0].mxu0 %v1940
      %v2243 = vpop.f32.mrb[0].mxu0
      %v2244 = vadd.f32 %v1867, %v2243
      %v2245 = vpop.f32.mrb[0].mxu0
      %2246 = vmatprep.mubr.f32.mxu0 0.0
      %2247 = vmatmul.mubr.f32.gmra.mrb[0].mxu0 %v1943
      %v2248 = vpop.f32.mrb[0].mxu0
      %v2249 = vadd.f32 %v1867, %v2248
      %v2250 = vpop.f32.mrb[0].mxu0
      %2251 = vmatprep.mubr.f32.mxu0 0.0
      %2252 = vmatmul.mubr.f32.gmra.mrb[0].mxu0 %v1946
      %v2253 = vpop.f32.mrb[0].mxu0
      %v2254 = vadd.f32 %v1867, %v2253
      %v2255 = vpop.f32.mrb[0].mxu0
      %2256 = vmatprep.mubr.f32.mxu0 0.0
      %2257 = vmatmul.mubr.f32.gmra.mrb[0].mxu0 %v1949
      %v2258 = vpop.f32.mrb[0].mxu0
      %v2259 = vadd.f32 %v1867, %v2258
      %v2260 = vpop.f32.mrb[0].mxu0
      %2261 = vmatprep.mubr.f32.mxu0 0.0
      %2262 = vmatmul.mubr.f32.gmra.mrb[0].mxu0 %v1952
      %v2263 = vpop.f32.mrb[0].mxu0
      %v2264 = vadd.f32 %v1867, %v2263
      %v2265 = vpop.f32.mrb[0].mxu0
      %2266 = vmatprep.mubr.f32.mxu0 0.0
      %2267 = vmatmul.mubr.f32.gmra.mrb[0].mxu0 %v1955
      %v2268 = vpop.f32.mrb[0].mxu0
      %v2269 = vadd.f32 %v1867, %v2268
      %v2270 = vpop.f32.mrb[0].mxu0
      %2271 = vmatprep.mubr.f32.mxu0 0.0
      %2272 = vmatmul.mubr.f32.gmra.mrb[0].mxu0 %v1958
      %v2273 = vpop.f32.mrb[0].mxu0
      %v2274 = vadd.f32 %v1867, %v2273
      %v2275 = vpop.f32.mrb[0].mxu0
      %2276 = vmatprep.mubr.f32.mxu0 0.0
      %2277 = vmatmul.mubr.f32.gmra.mrb[0].mxu0 %v1961
      %v2278 = vpop.f32.mrb[0].mxu0
      %v2279 = vadd.f32 %v1867, %v2278
      %v2280 = vpop.f32.mrb[0].mxu0
      %2281 = vmatprep.mubr.f32.mxu0 0.0
      %2282 = vmatmul.mubr.f32.gmra.mrb[0].mxu0 %v1964
      %v2283 = vpop.f32.mrb[0].mxu0
      %v2284 = vadd.f32 %v1867, %v2283
      %v2285 = vpop.f32.mrb[0].mxu0
      %2286 = vmatprep.mubr.f32.mxu0 0.0
      %2287 = vmatmul.mubr.f32.gmra.mrb[0].mxu0 %v1967
      %v2288 = vpop.f32.mrb[0].mxu0
      %v2289 = vadd.f32 %v1867, %v2288
      %v2290 = vpop.f32.mrb[0].mxu0
      %2291 = vmatprep.mubr.f32.mxu0 0.0
      %2292 = vmatmul.mubr.f32.gmra.mrb[0].mxu0 %v1970
      %v2293 = vpop.f32.mrb[0].mxu0
      %v2294 = vadd.f32 %v1867, %v2293
      %v2295 = vpop.f32.mrb[0].mxu0
      %2296 = vmatprep.mubr.f32.mxu0 0.0
      %2297 = vmatmul.mubr.f32.gmra.mrb[0].mxu0 %v1973
      %v2298 = vpop.f32.mrb[0].mxu0
      %v2299 = vadd.f32 %v1867, %v2298
      %v2300 = vpop.f32.mrb[0].mxu0
      %2301 = vmatprep.mubr.f32.mxu0 0.0
      %2302 = vmatmul.mubr.f32.gmra.mrb[0].mxu0 %v1976
      %v2303 = vpop.f32.mrb[0].mxu0
      %v2304 = vadd.f32 %v1867, %v2303
      %v2305 = vpop.f32.mrb[0].mxu0
      %2306 = vmatprep.mubr.f32.mxu0 0.0
      %2307 = vmatmul.mubr.f32.gmra.mrb[0].mxu0 %v1979
      %v2308 = vpop.f32.mrb[0].mxu0
      %v2309 = vadd.f32 %v1867, %v2308
      %v2310 = vpop.f32.mrb[0].mxu0
      %2311 = vmatprep.mubr.f32.mxu0 0.0
      %2312 = vmatmul.mubr.f32.gmra.mrb[0].mxu0 %v1982
      %v2313 = vpop.f32.mrb[0].mxu0
      %v2314 = vadd.f32 %v1867, %v2313
      %v2315 = vpop.f32.mrb[0].mxu0
      %2316 = vmatprep.mubr.f32.mxu0 0.0
      %2317 = vmatmul.mubr.f32.gmra.mrb[0].mxu0 %v1985
      %v2318 = vpop.f32.mrb[0].mxu0
      %v2319 = vadd.f32 %v1867, %v2318
      %v2320 = vpop.f32.mrb[0].mxu0
      %2321 = vmatprep.mubr.f32.mxu0 0.0
      %2322 = vmatmul.mubr.f32.gmra.mrb[0].mxu0 %v1988
      %v2323 = vpop.f32.mrb[0].mxu0
      %v2324 = vadd.f32 %v1867, %v2323
      %v2325 = vpop.f32.mrb[0].mxu0
      %2326 = vmatprep.mubr.f32.mxu0 0.0
      %2327 = vmatmul.mubr.f32.gmra.mrb[0].mxu0 %v1991
      %v2328 = vpop.f32.mrb[0].mxu0
      %v2329 = vadd.f32 %v1867, %v2328
      %v2330 = vpop.f32.mrb[0].mxu0
      %2331 = vmatprep.mubr.f32.mxu0 0.0
      %2332 = vmatmul.mubr.f32.gmra.mrb[0].mxu0 %v1994
      %v2333 = vpop.f32.mrb[0].mxu0
      %v2334 = vadd.f32 %v1867, %v2333
      %v2335 = vpop.f32.mrb[0].mxu0
      %2336 = vmatprep.mubr.f32.mxu0 0.0
      %2337 = vmatmul.mubr.f32.gmra.mrb[0].mxu0 %v1997
      %v2338 = vpop.f32.mrb[0].mxu0
      %v2339 = vadd.f32 %v1867, %v2338
      %v2340 = vpop.f32.mrb[0].mxu0
      %2341 = vmatprep.mubr.f32.mxu0 0.0
      %2342 = vmatmul.mubr.f32.gmra.mrb[0].mxu0 %v2000
      %v2343 = vpop.f32.mrb[0].mxu0
      %v2344 = vadd.f32 %v1867, %v2343
      %v2345 = vpop.f32.mrb[0].mxu0
      %2346 = vmatprep.mubr.f32.mxu0 0.0
      %2347 = vmatmul.mubr.f32.gmra.mrb[0].mxu0 %v2003
      %v2348 = vpop.f32.mrb[0].mxu0
      %v2349 = vadd.f32 %v1867, %v2348
      %v2350 = vpop.f32.mrb[0].mxu0
      %2351 = vmatprep.mubr.f32.mxu0 0.0
      %2352 = vmatmul.mubr.f32.gmra.mrb[0].mxu0 %v2006
      %v2353 = vpop.f32.mrb[0].mxu0
      %v2354 = vadd.f32 %v1867, %v2353
      %v2355 = vpop.f32.mrb[0].mxu0
      %2356 = vmatprep.mubr.f32.mxu0 0.0
      %2357 = vmatmul.mubr.f32.gmra.mrb[0].mxu0 %v2009
      %v2358 = vpop.f32.mrb[0].mxu0
      %v2359 = vadd.f32 %v1867, %v2358
      %v2360 = vpop.f32.mrb[0].mxu0
      %2361 = vmatprep.mubr.f32.mxu0 0.0
      %2362 = vmatmul.mubr.f32.gmra.mrb[0].mxu0 %v2012
      %v2363 = vpop.f32.mrb[0].mxu0
      %v2364 = vadd.f32 %v1867, %v2363
      %v2365 = vpop.f32.mrb[0].mxu0
      %2366 = vmatprep.mubr.f32.mxu0 0.0
      %2367 = vmatmul.mubr.f32.gmra.mrb[0].mxu0 %v2015
      %v2368 = vpop.f32.mrb[0].mxu0
      %v2369 = vadd.f32 %v1867, %v2368
      %v2370 = vpop.f32.mrb[0].mxu0
      %2371 = vmatprep.mubr.f32.mxu0 0.0
      %2372 = vmatmul.mubr.f32.gmra.mrb[0].mxu0 %v2018
      %v2373 = vpop.f32.mrb[0].mxu0
      %v2374 = vadd.f32 %v1867, %v2373
      %v2375 = vpop.f32.mrb[0].mxu0
      %2376 = vmatprep.mubr.f32.mxu0 0.0
      %2377 = vmatmul.mubr.f32.gmra.mrb[0].mxu0 %v2021
      %v2378 = vpop.f32.mrb[0].mxu0
      %v2379 = vadd.f32 %v1867, %v2378
      %v2380 = vpop.f32.mrb[0].mxu0
      %2381 = vmatprep.mubr.f32.mxu0 0.0
      %2382 = vmatmul.mubr.f32.gmra.mrb[0].mxu0 %v2024
      %v2383 = vpop.f32.mrb[0].mxu0
      %v2384 = vadd.f32 %v1867, %v2383
      %v2385 = vpop.f32.mrb[0].mxu0
      %2386 = vmatprep.mubr.f32.mxu0 0.0
      %2387 = vmatmul.mubr.f32.gmra.mrb[0].mxu0 %v2027
      %v2388 = vpop.f32.mrb[0].mxu0
      %v2389 = vadd.f32 %v1867, %v2388
      %v2390 = vpop.f32.mrb[0].mxu0
      %2391 = vmatprep.mubr.f32.mxu0 0.0
      %2392 = vmatmul.mubr.f32.gmra.mrb[0].mxu0 %v2030
      %v2393 = vpop.f32.mrb[0].mxu0
      %v2394 = vadd.f32 %v1867, %v2393
      %v2395 = vpop.f32.mrb[0].mxu0
      %2396 = vmatprep.mubr.f32.mxu0 0.0
      %2397 = vmatmul.mubr.f32.gmra.mrb[0].mxu0 %v2033
      %v2398 = vpop.f32.mrb[0].mxu0
      %v2399 = vadd.f32 %v1867, %v2398
      %v2400 = vpop.f32.mrb[0].mxu0
      %2401 = vmatprep.mubr.f32.mxu0 0.0
      %2402 = vmatmul.mubr.f32.gmra.mrb[0].mxu0 %v2036
      %v2403 = vpop.f32.mrb[0].mxu0
      %v2404 = vadd.f32 %v1867, %v2403
      %v2405 = vpop.f32.mrb[0].mxu0
      %2406 = vmatprep.mubr.f32.mxu0 0.0
      %2407 = vmatmul.mubr.f32.gmra.mrb[0].mxu0 %v2039
      %v2408 = vpop.f32.mrb[0].mxu0
      %v2409 = vadd.f32 %v1867, %v2408
      %v2410 = vpop.f32.mrb[0].mxu0
      %2411 = vmatprep.mubr.f32.mxu0 0.0
      %2412 = vmatmul.mubr.f32.gmra.mrb[0].mxu0 %v2042
      %v2413 = vpop.f32.mrb[0].mxu0
      %v2414 = vadd.f32 %v1867, %v2413
      %v2415 = vpop.f32.mrb[0].mxu0
      %2416 = vmatprep.mubr.f32.mxu0 0.0
      %2417 = vmatmul.mubr.f32.gmra.mrb[0].mxu0 %v2045
      %v2418 = vpop.f32.mrb[0].mxu0
      %v2419 = vadd.f32 %v1867, %v2418
      %v2420 = vpop.f32.mrb[0].mxu0
      %2421 = vmatprep.mubr.f32.mxu0 0.0
      %2422 = vmatmul.mubr.f32.gmra.mrb[0].mxu0 %v2048
      %v2423 = vpop.f32.mrb[0].mxu0
      %v2424 = vadd.f32 %v1867, %v2423
      %v2425 = vpop.f32.mrb[0].mxu0
      %2426 = vmatprep.mubr.f32.mxu0 0.0
      %2427 = vmatmul.mubr.f32.gmra.mrb[0].mxu0 %v2051
      %v2428 = vpop.f32.mrb[0].mxu0
      %v2429 = vadd.f32 %v1867, %v2428
      %v2430 = vpop.f32.mrb[0].mxu0
      %2431 = vmatprep.mubr.f32.mxu0 0.0
      %2432 = vmatmul.mubr.f32.gmra.mrb[0].mxu0 %v2054
      %v2433 = vpop.f32.mrb[0].mxu0
      %v2434 = vadd.f32 %v1867, %v2433
      %v2435 = vpop.f32.mrb[0].mxu0
      %2436 = vmatprep.mubr.f32.mxu0 0.0
      %2437 = vmatmul.mubr.f32.gmra.mrb[0].mxu0 %v2057
      %v2438 = vpop.f32.mrb[0].mxu0
      %v2439 = vadd.f32 %v1867, %v2438
      %v2440 = vpop.f32.mrb[0].mxu0
      %2441 = vmatprep.mubr.f32.mxu0 0.0
      %2442 = vmatmul.mubr.f32.gmra.mrb[0].mxu0 %v2060
      %v2443 = vpop.f32.mrb[0].mxu0
      %v2444 = vadd.f32 %v1867, %v2443
      %v2445 = vpop.f32.mrb[0].mxu0
      %2446 = vdwg.mxu0
      %vm2447 = vcmask 23552
      %2448 = vst.msk [vmem:[%s302] sm:$0xff] %vm2447, %v2129
      %2449 = vst.msk [vmem:[%s302 + $0x8] sm:$0xff] %vm2447, %v2134
      %2450 = vst.msk [vmem:[%s302 + $0x10] sm:$0xff] %vm2447, %v2139
      %2451 = vst.msk [vmem:[%s302 + $0x18] sm:$0xff] %vm2447, %v2144
      %2452 = vst.msk [vmem:[%s302 + $0x20] sm:$0xff] %vm2447, %v2149
      %2453 = vst.msk [vmem:[%s302 + $0x28] sm:$0xff] %vm2447, %v2154
      %2454 = vst.msk [vmem:[%s302 + $0x30] sm:$0xff] %vm2447, %v2159
      %2455 = vst.msk [vmem:[%s302 + $0x38] sm:$0xff] %vm2447, %v2164
      %2456 = vst.msk [vmem:[%s302 + $0x40] sm:$0xff] %vm2447, %v2169
      %2457 = vst.msk [vmem:[%s302 + $0x48] sm:$0xff] %vm2447, %v2174
      %2458 = vst.msk [vmem:[%s302 + $0x50] sm:$0xff] %vm2447, %v2179
      %2459 = vst.msk [vmem:[%s302 + $0x58] sm:$0xff] %vm2447, %v2184
      %2460 = vst.msk [vmem:[%s302 + $0x60] sm:$0xff] %vm2447, %v2189
      %2461 = vst.msk [vmem:[%s302 + $0x68] sm:$0xff] %vm2447, %v2194
      %2462 = vst.msk [vmem:[%s302 + $0x70] sm:$0xff] %vm2447, %v2199
      %2463 = vst.msk [vmem:[%s302 + $0x78] sm:$0xff] %vm2447, %v2204
      %2464 = vst.msk [vmem:[%s302 + $0x80] sm:$0xff] %vm2447, %v2209
      %2465 = vst.msk [vmem:[%s302 + $0x88] sm:$0xff] %vm2447, %v2214
      %2466 = vst.msk [vmem:[%s302 + $0x90] sm:$0xff] %vm2447, %v2219
      %2467 = vst.msk [vmem:[%s302 + $0x98] sm:$0xff] %vm2447, %v2224
      %2468 = vst.msk [vmem:[%s302 + $0xa0] sm:$0xff] %vm2447, %v2229
      %2469 = vst.msk [vmem:[%s302 + $0xa8] sm:$0xff] %vm2447, %v2234
      %2470 = vst.msk [vmem:[%s302 + $0xb0] sm:$0xff] %vm2447, %v2239
      %2471 = vst.msk [vmem:[%s302 + $0xb8] sm:$0xff] %vm2447, %v2244
      %2472 = vst.msk [vmem:[%s302 + $0xc0] sm:$0xff] %vm2447, %v2249
      %2473 = vst.msk [vmem:[%s302 + $0xc8] sm:$0xff] %vm2447, %v2254
      %2474 = vst.msk [vmem:[%s302 + $0xd0] sm:$0xff] %vm2447, %v2259
      %2475 = vst.msk [vmem:[%s302 + $0xd8] sm:$0xff] %vm2447, %v2264
      %2476 = vst.msk [vmem:[%s302 + $0xe0] sm:$0xff] %vm2447, %v2269
      %2477 = vst.msk [vmem:[%s302 + $0xe8] sm:$0xff] %vm2447, %v2274
      %2478 = vst.msk [vmem:[%s302 + $0xf0] sm:$0xff] %vm2447, %v2279
      %2479 = vst.msk [vmem:[%s302 + $0xf8] sm:$0xff] %vm2447, %v2284
      %2480 = vst.msk [vmem:[%s302 + $0x100] sm:$0xff] %vm2447, %v2289
      %2481 = vst.msk [vmem:[%s302 + $0x108] sm:$0xff] %vm2447, %v2294
      %2482 = vst.msk [vmem:[%s302 + $0x110] sm:$0xff] %vm2447, %v2299
      %2483 = vst.msk [vmem:[%s302 + $0x118] sm:$0xff] %vm2447, %v2304
      %2484 = vst.msk [vmem:[%s302 + $0x120] sm:$0xff] %vm2447, %v2309
      %2485 = vst.msk [vmem:[%s302 + $0x128] sm:$0xff] %vm2447, %v2314
      %2486 = vst.msk [vmem:[%s302 + $0x130] sm:$0xff] %vm2447, %v2319
      %2487 = vst.msk [vmem:[%s302 + $0x138] sm:$0xff] %vm2447, %v2324
      %2488 = vst.msk [vmem:[%s302 + $0x140] sm:$0xff] %vm2447, %v2329
      %2489 = vst.msk [vmem:[%s302 + $0x148] sm:$0xff] %vm2447, %v2334
      %2490 = vst.msk [vmem:[%s302 + $0x150] sm:$0xff] %vm2447, %v2339
      %2491 = vst.msk [vmem:[%s302 + $0x158] sm:$0xff] %vm2447, %v2344
      %2492 = vst.msk [vmem:[%s302 + $0x160] sm:$0xff] %vm2447, %v2349
      %2493 = vst.msk [vmem:[%s302 + $0x168] sm:$0xff] %vm2447, %v2354
      %2494 = vst.msk [vmem:[%s302 + $0x170] sm:$0xff] %vm2447, %v2359
      %2495 = vst.msk [vmem:[%s302 + $0x178] sm:$0xff] %vm2447, %v2364
      %2496 = vst.msk [vmem:[%s302 + $0x180] sm:$0xff] %vm2447, %v2369
      %2497 = vst.msk [vmem:[%s302 + $0x188] sm:$0xff] %vm2447, %v2374
      %2498 = vst.msk [vmem:[%s302 + $0x190] sm:$0xff] %vm2447, %v2379
      %2499 = vst.msk [vmem:[%s302 + $0x198] sm:$0xff] %vm2447, %v2384
      %2500 = vst.msk [vmem:[%s302 + $0x1a0] sm:$0xff] %vm2447, %v2389
      %2501 = vst.msk [vmem:[%s302 + $0x1a8] sm:$0xff] %vm2447, %v2394
      %2502 = vst.msk [vmem:[%s302 + $0x1b0] sm:$0xff] %vm2447, %v2399
      %2503 = vst.msk [vmem:[%s302 + $0x1b8] sm:$0xff] %vm2447, %v2404
      %2504 = vst.msk [vmem:[%s302 + $0x1c0] sm:$0xff] %vm2447, %v2409
      %2505 = vst.msk [vmem:[%s302 + $0x1c8] sm:$0xff] %vm2447, %v2414
      %2506 = vst.msk [vmem:[%s302 + $0x1d0] sm:$0xff] %vm2447, %v2419
      %2507 = vst.msk [vmem:[%s302 + $0x1d8] sm:$0xff] %vm2447, %v2424
      %2508 = vst.msk [vmem:[%s302 + $0x1e0] sm:$0xff] %vm2447, %v2429
      %2509 = vst.msk [vmem:[%s302 + $0x1e8] sm:$0xff] %vm2447, %v2434
      %2510 = vst.msk [vmem:[%s302 + $0x1f0] sm:$0xff] %vm2447, %v2439
      %2511 = vst.msk [vmem:[%s302 + $0x1f8] sm:$0xff] %vm2447, %v2444
      %s2512 = smul.u32 64, %s18
      %p2513 = scmp.lt.s32.totalorder %s2512, 127
      %s2514 = scalar_select %p2513, %s2512, 127
      %s2515 = smul.addr %s2514, 8
      %s2516 = scalar_lea.vmem %s7, %s2515
      // Predicated region
      $region49: #{tclassifier_forward.1} parent=47 // pred_check
        %p2517 = pneg %p193
      $region50: #{tclassifier_forward.1} parent=47 // pred_check_branch
        %2519 = sbr.rel (%p2517) target = $region52
      $region51: #{tclassifier_forward.1} parent=47 // pred_region
        %s2520 = smul.u32 64, %s18
      $region52: #{tclassifier_forward.1} parent=47 // pred_fallthru
        _
    $region48: #{tclassifier_forward.1} parent=5 // pred_fallthru
      _
    %p2521 = scmp.le.s32.totalorder 2, %s13
    // Predicated region
    $region53: #{tclassifier_forward.1} parent=5 // pred_check
      %p2522 = pneg %p2521
    $region54: #{tclassifier_forward.1} parent=5 // pred_check_branch
      %2524 = sbr.rel (%p2522) target = $region56
    $region55: #{tclassifier_forward.1} parent=5 // pred_region
      %s2525 = ssub.s32 %s13, 2
      // Predicated region
      $region57: #{tclassifier_forward.1} parent=55 // pred_check
        %p2526 = pneg %p199
      $region58: #{tclassifier_forward.1} parent=55 // pred_check_branch
        %2528 = sbr.rel (%p2526) target = $region60
      $region59: #{tclassifier_forward.1} parent=55 // pred_region
        %s2529 = smul.u32 64, %s19
        %p2530 = scmp.lt.s32.totalorder %s2529, 127
        %s2531 = scalar_select %p2530, %s2529, 127
        %s2532 = smul.addr %s2531, 8
        %s2533 = scalar_lea.vmem %s7, %s2532
      $region60: #{tclassifier_forward.1} parent=55 // pred_fallthru
        _
    $region56: #{tclassifier_forward.1} parent=5 // pred_fallthru
      _
  $region6: #{tclassifier_forward.1} parent=0 // loop_footer
    %s17 = sadd.s32 1, %s13
  $region7: #{tclassifier_forward.1} parent=0 // loop_footer_branch
    %12 = sbr.rel target = $region3
  $region8: #{tclassifier_forward.1} parent=0 // loop_exit
    _

</llo_original>
